<compile_context>
chip_gen: v5e
topology: v5e:2x2
jax: 0.10.0
libtpu: 0.0.40
codegen_flags: <defaults>
</compile_context>

<pallas_src>
import jax
import jax.numpy as jnp
import numpy as np
from jax import lax
from jax.experimental import pallas as pl
from jax.experimental.pallas import tpu as pltpu

EPS = 1e-5
K = 5      # kernel size
PAD = 2    # padding
VMEM_LIMIT = 64 * 1024 * 1024


# ----------------------------------------------------------------------------
# Pallas kernels
# ----------------------------------------------------------------------------
def conv_bias_stats_kernel(xcol_ref, w_ref, b_ref, y_ref, sum_ref, sq_ref):
    """One lane-dense matmul tile of the conv + bias, plus BN batch-stat partials.

    xcol_ref: (1, KKC, THW)  bf16 im2col'd input tile (THW on lanes)
    w_ref   : (Cout, KKC)    bf16 reshaped conv weights
    b_ref   : (Cout, 1)      f32 bias
    y_ref   : (1, Cout, THW) bf16 conv output tile (lane-dense)
    sum_ref : (1, Cout, 1)   f32 per-channel sum   (accumulated over the HW-tile axis)
    sq_ref  : (1, Cout, 1)   f32 per-channel sumsq (accumulated over the HW-tile axis)
    """
    t = pl.program_id(1)

    x = xcol_ref[0]                                             # (KKC, THW) bf16
    w = w_ref[...]                                              # (Cout, KKC) bf16
    y = jnp.dot(w, x, preferred_element_type=jnp.float32)       # (Cout, THW) f32
    y = y + b_ref[...]                                          # broadcast over lanes
    y_ref[0] = y.astype(y_ref.dtype)

    s = jnp.sum(y, axis=1, keepdims=True)                       # (Cout, 1)
    sq = jnp.sum(y * y, axis=1, keepdims=True)                  # (Cout, 1)

    @pl.when(t == 0)
    def _():
        sum_ref[...] = jnp.zeros_like(sum_ref)
        sq_ref[...] = jnp.zeros_like(sq_ref)

    sum_ref[...] += s[None]
    sq_ref[...] += sq[None]


def bn_relu_kernel(y_ref, scale_ref, shift_ref, o_ref):
    """Folded BatchNorm affine + ReLU on a lane-dense (Cout, THW) tile."""
    y = y_ref[0].astype(jnp.float32)                            # (Cout, THW)
    o_ref[0] = jnp.maximum(y * scale_ref[...] + shift_ref[...], 0.0).astype(o_ref.dtype)


# ----------------------------------------------------------------------------
# Wrappers
# ----------------------------------------------------------------------------
def _pick_hw_tile(HW):
    for t in (2048, 1024, 512, 256, 128):
        if HW % t == 0:
            return t
    return HW


def _weight_matrix(w_hwio):
    """(K, K, Cin, Cout) HWIO -> (Cout, K*K*Cin) bf16, row order (kh, kw, cin)."""
    Kh, Kw, Ci, Co = w_hwio.shape
    return jnp.transpose(w_hwio, (3, 0, 1, 2)).reshape(Co, Kh * Kw * Ci).astype(jnp.bfloat16)


def _im2col(x_nchw):
    """(N, C, H, W) -> (N, K*K*C, H*W) bf16, row order (kh, kw, c), zero 'same' padding."""
    N, C, H, W = x_nchw.shape
    xp = jnp.pad(x_nchw, ((0, 0), (0, 0), (PAD, PAD), (PAD, PAD)))
    cols = [xp[:, :, kh:kh + H, kw:kw + W].reshape(N, C, H * W)
            for kh in range(K) for kw in range(K)]
    return jnp.concatenate(cols, axis=1).astype(jnp.bfloat16)


def conv_with_stats(xcol, wmat, bias):
    """xcol: (N, KKC, HW) bf16 -> y (N, Cout, HW) bf16, per-(n) channel sum/sumsq."""
    N, KKC, HW = xcol.shape
    Cout = wmat.shape[0]
    THW = _pick_hw_tile(HW)
    T = HW // THW
    b2 = bias.reshape(Cout, 1).astype(jnp.float32)

    y, s, sq = pl.pallas_call(
        conv_bias_stats_kernel,
        out_shape=(
            jax.ShapeDtypeStruct((N, Cout, HW), jnp.bfloat16),
            jax.ShapeDtypeStruct((N, Cout, 1), jnp.float32),
            jax.ShapeDtypeStruct((N, Cout, 1), jnp.float32),
        ),
        grid=(N, T),
        in_specs=[
            pl.BlockSpec((1, KKC, THW), lambda n, t: (n, 0, t)),
            pl.BlockSpec((Cout, KKC), lambda n, t: (0, 0)),
            pl.BlockSpec((Cout, 1), lambda n, t: (0, 0)),
        ],
        out_specs=[
            pl.BlockSpec((1, Cout, THW), lambda n, t: (n, 0, t)),
            pl.BlockSpec((1, Cout, 1), lambda n, t: (n, 0, 0)),
            pl.BlockSpec((1, Cout, 1), lambda n, t: (n, 0, 0)),
        ],
        compiler_params=pltpu.CompilerParams(
            dimension_semantics=("parallel", "arbitrary"),
            vmem_limit_bytes=VMEM_LIMIT),
    )(xcol, wmat, b2)
    return y, s, sq


def bn_relu(y, scale, shift):
    """y: (N, Cout, HW) bf16 -> (N, Cout, HW) f32, lane-dense affine + ReLU."""
    N, Cout, HW = y.shape
    THW = _pick_hw_tile(HW)
    T = HW // THW
    return pl.pallas_call(
        bn_relu_kernel,
        out_shape=jax.ShapeDtypeStruct((N, Cout, HW), jnp.float32),
        grid=(N, T),
        in_specs=[
            pl.BlockSpec((1, Cout, THW), lambda n, t: (n, 0, t)),
            pl.BlockSpec((Cout, 1), lambda n, t: (0, 0)),
            pl.BlockSpec((Cout, 1), lambda n, t: (0, 0)),
        ],
        out_specs=pl.BlockSpec((1, Cout, THW), lambda n, t: (n, 0, t)),
        compiler_params=pltpu.CompilerParams(
            dimension_semantics=("parallel", "parallel"),
            vmem_limit_bytes=VMEM_LIMIT),
    )(y, scale.reshape(Cout, 1).astype(jnp.float32),
      shift.reshape(Cout, 1).astype(jnp.float32))


def _bn_fold_from_stats(sum_out, sq_out, gamma, beta, count):
    """Training-mode BN folded into per-channel scale/shift from kernel-emitted sums."""
    s = jnp.sum(sum_out[:, :, 0], axis=0)                       # (Cout,)
    sq = jnp.sum(sq_out[:, :, 0], axis=0)                       # (Cout,)
    mean = s / count
    var = jnp.maximum(sq / count - mean * mean, 0.0)            # biased batch variance
    scale = gamma / jnp.sqrt(var + EPS)
    shift = beta - mean * scale
    return scale, shift


@jax.jit
def double_conv_forward(x_nchw, params):
    N, Cin, H, W = x_nchw.shape
    Cout = params["b1"].shape[0]
    count = float(N * H * W)

    wmat1 = _weight_matrix(params["w1"])                        # (Cout, K*K*Cin)
    wmat2 = _weight_matrix(params["w2"])                        # (Cout, K*K*Cout)

    # --- conv1 (+ BN1 batch stats emitted by the kernel) ---
    xcol1 = _im2col(x_nchw.astype(jnp.float32))                 # (N, K*K*Cin, HW)
    y1, s1p, q1p = conv_with_stats(xcol1, wmat1, params["b1"])
    scale1, shift1 = _bn_fold_from_stats(s1p, q1p, params["g1"], params["beta1"], count)

    # --- BN1 + ReLU fused into the conv2 im2col pass (padding stays exactly 0) ---
    a1 = jnp.maximum(y1.astype(jnp.float32) * scale1[None, :, None]
                     + shift1[None, :, None], 0.0).reshape(N, Cout, H, W)
    xcol2 = _im2col(a1)                                         # (N, K*K*Cout, HW)

    # --- conv2 (+ BN2 batch stats) ---
    y2, s2p, q2p = conv_with_stats(xcol2, wmat2, params["b2"])
    scale2, shift2 = _bn_fold_from_stats(s2p, q2p, params["g2"], params["beta2"], count)

    # --- final BN2 + ReLU (lane-dense Pallas elementwise pass) ---
    out = bn_relu(y2, scale2, shift2)                           # (N, Cout, HW) f32
    return out.reshape(N, Cout, H, W)


# ----------------------------------------------------------------------------
# Pure-JAX f32 reference (sanity check)
# ----------------------------------------------------------------------------
def double_conv_ref(x_nchw, params):
    dn = ("NCHW", "HWIO", "NCHW")

    def block(inp, w, b, g, beta):
        y = lax.conv_general_dilated(inp, w, (1, 1), [(PAD, PAD), (PAD, PAD)],
                                     dimension_numbers=dn)
        y = y + b[None, :, None, None]
        mean = jnp.mean(y, axis=(0, 2, 3))
        var = jnp.mean(jnp.square(y - mean[None, :, None, None]), axis=(0, 2, 3))
        s = g / jnp.sqrt(var + EPS)
        t = beta - mean * s
        return jnp.maximum(y * s[None, :, None, None] + t[None, :, None, None], 0.0)

    a1 = block(x_nchw.astype(jnp.float32), params["w1"], params["b1"],
               params["g1"], params["beta1"])
    a2 = block(a1, params["w2"], params["b2"], params["g2"], params["beta2"])
    return a2


# ----------------------------------------------------------------------------
# Deterministic parameter init (shapes match DoubleConv(in_ch, out_ch))
# ----------------------------------------------------------------------------
def init_params(key, in_ch, out_ch):
    ks = jax.random.split(key, 8)
    fan1 = in_ch * K * K
    fan2 = out_ch * K * K
    return {
        "w1": jax.random.normal(ks[0], (K, K, in_ch, out_ch), jnp.float32) / np.sqrt(fan1),
        "b1": jax.random.normal(ks[1], (out_ch,), jnp.float32) * 0.1,
        "g1": 1.0 + 0.1 * jax.random.normal(ks[2], (out_ch,), jnp.float32),
        "beta1": 0.1 * jax.random.normal(ks[3], (out_ch,), jnp.float32),
        "w2": jax.random.normal(ks[4], (K, K, out_ch, out_ch), jnp.float32) / np.sqrt(fan2),
        "b2": jax.random.normal(ks[5], (out_ch,), jnp.float32) * 0.1,
        "g2": 1.0 + 0.1 * jax.random.normal(ks[6], (out_ch,), jnp.float32),
        "beta2": 0.1 * jax.random.normal(ks[7], (out_ch,), jnp.float32),
    }


if __name__ == "__main__":
    key = jax.random.PRNGKey(0)
    k_x, k_p = jax.random.split(key)

    N, IN_CH, OUT_CH, H, W = 2, 4, 8, 16, 16
    x = jax.random.normal(k_x, (N, IN_CH, H, W), jnp.float32)   # NCHW, like PyTorch
    params = init_params(k_p, IN_CH, OUT_CH)

    out = jax.block_until_ready(double_conv_forward(x, params))
    assert out.shape == (N, OUT_CH, H, W), out.shape

    ref = jax.block_until_ready(double_conv_ref(x, params))
    np.testing.assert_allclose(np.asarray(out), np.asarray(ref), rtol=5e-2, atol=5e-2)

    print("KERNEL_OK")
</pallas_src>

<mosaic_0001>
module attributes {stable_mosaic.version = 11 : i64} {
  func.func @conv_bias_stats_kernel(%arg0: i32, %arg1: i32, %arg2: memref<1x100x256xbf16, #tpu.memory_space<vmem>>, %arg3: memref<8x100xbf16, #tpu.memory_space<vmem>>, %arg4: memref<8x1xf32, #tpu.memory_space<vmem>>, %arg5: memref<1x8x256xbf16, #tpu.memory_space<vmem>>, %arg6: memref<1x8x1xf32, #tpu.memory_space<vmem>>, %arg7: memref<1x8x1xf32, #tpu.memory_space<vmem>>) attributes {dimension_semantics = [#tpu.dimension_semantics<parallel>, #tpu.dimension_semantics<arbitrary>], iteration_bounds = array<i64: 2, 1>, scalar_prefetch = 0 : i64, scratch_operands = 0 : i64, tpu.core_type = #tpu.core_type<tc>, window_params = [{transform_indices = @transform_0, window_bounds = array<i64: 1, 100, 256>}, {pipeline_mode = #tpu.pipeline_mode<synchronous>, transform_indices = @transform_1, window_bounds = array<i64: 8, 100>}, {pipeline_mode = #tpu.pipeline_mode<synchronous>, transform_indices = @transform_2, window_bounds = array<i64: 8, 1>}, {transform_indices = @transform_3, window_bounds = array<i64: 1, 8, 256>}, {transform_indices = @transform_4, window_bounds = array<i64: 1, 8, 1>}, {transform_indices = @transform_5, window_bounds = array<i64: 1, 8, 1>}]} {
    %c0 = arith.constant 0 : index
    %c0_0 = arith.constant 0 : index
    %c0_1 = arith.constant 0 : index
    %0 = vector.load %arg2[%c0, %c0_0, %c0_1] : memref<1x100x256xbf16, #tpu.memory_space<vmem>>, vector<1x100x256xbf16>
    %1 = vector.shape_cast %0 : vector<1x100x256xbf16> to vector<100x256xbf16>
    %c0_2 = arith.constant 0 : index
    %c0_3 = arith.constant 0 : index
    %2 = vector.load %arg3[%c0_2, %c0_3] : memref<8x100xbf16, #tpu.memory_space<vmem>>, vector<8x100xbf16>
    %cst = arith.constant dense<0.000000e+00> : vector<8x256xf32>
    %3 = tpu.matmul %2, %1, %cst {dimension_numbers = #tpu.dot_dimension_numbers<[1], [0], [0], [1], [0, 0, 1, 1], [], []>} : vector<8x100xbf16>, vector<100x256xbf16>, vector<8x256xf32> -> vector<8x256xf32>
    %c0_4 = arith.constant 0 : index
    %c0_5 = arith.constant 0 : index
    %4 = vector.load %arg4[%c0_4, %c0_5] : memref<8x1xf32, #tpu.memory_space<vmem>>, vector<8x1xf32>
    %5 = vector.broadcast %4 : vector<8x1xf32> to vector<8x256xf32>
    %6 = arith.addf %3, %5 : vector<8x256xf32>
    %7 = arith.truncf %6 : vector<8x256xf32> to vector<8x256xbf16>
    %c0_6 = arith.constant 0 : index
    %c0_7 = arith.constant 0 : index
    %c0_8 = arith.constant 0 : index
    %8 = vector.load %arg5[%c0_6, %c0_7, %c0_8] : memref<1x8x256xbf16, #tpu.memory_space<vmem>>, vector<1x8x256xbf16>
    %9 = vector.shape_cast %8 : vector<1x8x256xbf16> to vector<8x256xbf16>
    %10 = vector.shape_cast %7 : vector<8x256xbf16> to vector<1x8x256xbf16>
    tpu.vector_store %arg5[%c0_6, %c0_7, %c0_8], %10 {strides = array<i32>} : memref<1x8x256xbf16, #tpu.memory_space<vmem>>, vector<1x8x256xbf16>,
    %cst_9 = arith.constant dense<0.000000e+00> : vector<8xf32>
    %11 = vector.multi_reduction <add>, %6, %cst_9 [1] : vector<8x256xf32> to vector<8xf32>
    %12 = vector.shape_cast %11 : vector<8xf32> to vector<8x1xf32>
    %13 = arith.mulf %6, %6 : vector<8x256xf32>
    %cst_10 = arith.constant dense<0.000000e+00> : vector<8xf32>
    %14 = vector.multi_reduction <add>, %13, %cst_10 [1] : vector<8x256xf32> to vector<8xf32>
    %15 = vector.shape_cast %14 : vector<8xf32> to vector<8x1xf32>
    %c0_i32 = arith.constant 0 : i32
    %16 = arith.cmpi eq, %arg1, %c0_i32 : i32
    %17 = arith.extui %16 : i1 to i32
    %c0_i32_11 = arith.constant 0 : i32
    %18 = arith.cmpi ne, %17, %c0_i32_11 : i32
    scf.if %18 {
      %cst_24 = arith.constant 0.000000e+00 : f32
      %27 = vector.broadcast %cst_24 : f32 to vector<1x8x1xf32>
      %c0_25 = arith.constant 0 : index
      %c0_26 = arith.constant 0 : index
      %c0_27 = arith.constant 0 : index
      %28 = vector.load %arg6[%c0_25, %c0_26, %c0_27] : memref<1x8x1xf32, #tpu.memory_space<vmem>>, vector<1x8x1xf32>
      tpu.vector_store %arg6[%c0_25, %c0_26, %c0_27], %27 {strides = array<i32>} : memref<1x8x1xf32, #tpu.memory_space<vmem>>, vector<1x8x1xf32>,
      %cst_28 = arith.constant 0.000000e+00 : f32
      %29 = vector.broadcast %cst_28 : f32 to vector<1x8x1xf32>
      %c0_29 = arith.constant 0 : index
      %c0_30 = arith.constant 0 : index
      %c0_31 = arith.constant 0 : index
      %30 = vector.load %arg7[%c0_29, %c0_30, %c0_31] : memref<1x8x1xf32, #tpu.memory_space<vmem>>, vector<1x8x1xf32>
      tpu.vector_store %arg7[%c0_29, %c0_30, %c0_31], %29 {strides = array<i32>} : memref<1x8x1xf32, #tpu.memory_space<vmem>>, vector<1x8x1xf32>,
    } else {
    }
    %c0_12 = arith.constant 0 : index
    %c0_13 = arith.constant 0 : index
    %c0_14 = arith.constant 0 : index
    %19 = vector.load %arg6[%c0_12, %c0_13, %c0_14] : memref<1x8x1xf32, #tpu.memory_space<vmem>>, vector<1x8x1xf32>
    %20 = vector.shape_cast %12 : vector<8x1xf32> to vector<1x8x1xf32>
    %21 = arith.addf %19, %20 : vector<1x8x1xf32>
    %c0_15 = arith.constant 0 : index
    %c0_16 = arith.constant 0 : index
    %c0_17 = arith.constant 0 : index
    %22 = vector.load %arg6[%c0_15, %c0_16, %c0_17] : memref<1x8x1xf32, #tpu.memory_space<vmem>>, vector<1x8x1xf32>
    tpu.vector_store %arg6[%c0_15, %c0_16, %c0_17], %21 {strides = array<i32>} : memref<1x8x1xf32, #tpu.memory_space<vmem>>, vector<1x8x1xf32>,
    %c0_18 = arith.constant 0 : index
    %c0_19 = arith.constant 0 : index
    %c0_20 = arith.constant 0 : index
    %23 = vector.load %arg7[%c0_18, %c0_19, %c0_20] : memref<1x8x1xf32, #tpu.memory_space<vmem>>, vector<1x8x1xf32>
    %24 = vector.shape_cast %15 : vector<8x1xf32> to vector<1x8x1xf32>
    %25 = arith.addf %23, %24 : vector<1x8x1xf32>
    %c0_21 = arith.constant 0 : index
    %c0_22 = arith.constant 0 : index
    %c0_23 = arith.constant 0 : index
    %26 = vector.load %arg7[%c0_21, %c0_22, %c0_23] : memref<1x8x1xf32, #tpu.memory_space<vmem>>, vector<1x8x1xf32>
    tpu.vector_store %arg7[%c0_21, %c0_22, %c0_23], %25 {strides = array<i32>} : memref<1x8x1xf32, #tpu.memory_space<vmem>>, vector<1x8x1xf32>,
    return
  }
  func.func @transform_0(%arg0: i32, %arg1: i32) -> (i32, i32, i32) {
    %c0_i32 = arith.constant 0 : i32
    %c0_i32_0 = arith.constant 0 : i32
    return %arg0, %c0_i32, %arg1 : i32, i32, i32
  }
  func.func @transform_1(%arg0: i32, %arg1: i32) -> (i32, i32) {
    %c0_i32 = arith.constant 0 : i32
    %c0_i32_0 = arith.constant 0 : i32
    %c0_i32_1 = arith.constant 0 : i32
    return %c0_i32, %c0_i32_0 : i32, i32
  }
  func.func @transform_2(%arg0: i32, %arg1: i32) -> (i32, i32) {
    %c0_i32 = arith.constant 0 : i32
    %c0_i32_0 = arith.constant 0 : i32
    %c0_i32_1 = arith.constant 0 : i32
    return %c0_i32, %c0_i32_0 : i32, i32
  }
  func.func @transform_3(%arg0: i32, %arg1: i32) -> (i32, i32, i32) {
    %c0_i32 = arith.constant 0 : i32
    %c0_i32_0 = arith.constant 0 : i32
    return %arg0, %c0_i32, %arg1 : i32, i32, i32
  }
  func.func @transform_4(%arg0: i32, %arg1: i32) -> (i32, i32, i32) {
    %c0_i32 = arith.constant 0 : i32
    %c0_i32_0 = arith.constant 0 : i32
    %c0_i32_1 = arith.constant 0 : i32
    return %arg0, %c0_i32, %c0_i32_0 : i32, i32, i32
  }
  func.func @transform_5(%arg0: i32, %arg1: i32) -> (i32, i32, i32) {
    %c0_i32 = arith.constant 0 : i32
    %c0_i32_0 = arith.constant 0 : i32
    %c0_i32_1 = arith.constant 0 : i32
    return %arg0, %c0_i32, %c0_i32_0 : i32, i32, i32
  }
}

module attributes {stable_mosaic.version = 11 : i64} {
  func.func @conv_bias_stats_kernel(%arg0: i32, %arg1: i32, %arg2: memref<1x200x256xbf16, #tpu.memory_space<vmem>>, %arg3: memref<8x200xbf16, #tpu.memory_space<vmem>>, %arg4: memref<8x1xf32, #tpu.memory_space<vmem>>, %arg5: memref<1x8x256xbf16, #tpu.memory_space<vmem>>, %arg6: memref<1x8x1xf32, #tpu.memory_space<vmem>>, %arg7: memref<1x8x1xf32, #tpu.memory_space<vmem>>) attributes {dimension_semantics = [#tpu.dimension_semantics<parallel>, #tpu.dimension_semantics<arbitrary>], iteration_bounds = array<i64: 2, 1>, scalar_prefetch = 0 : i64, scratch_operands = 0 : i64, tpu.core_type = #tpu.core_type<tc>, window_params = [{transform_indices = @transform_0, window_bounds = array<i64: 1, 200, 256>}, {pipeline_mode = #tpu.pipeline_mode<synchronous>, transform_indices = @transform_1, window_bounds = array<i64: 8, 200>}, {pipeline_mode = #tpu.pipeline_mode<synchronous>, transform_indices = @transform_2, window_bounds = array<i64: 8, 1>}, {transform_indices = @transform_3, window_bounds = array<i64: 1, 8, 256>}, {transform_indices = @transform_4, window_bounds = array<i64: 1, 8, 1>}, {transform_indices = @transform_5, window_bounds = array<i64: 1, 8, 1>}]} {
    %c0 = arith.constant 0 : index
    %c0_0 = arith.constant 0 : index
    %c0_1 = arith.constant 0 : index
    %0 = vector.load %arg2[%c0, %c0_0, %c0_1] : memref<1x200x256xbf16, #tpu.memory_space<vmem>>, vector<1x200x256xbf16>
    %1 = vector.shape_cast %0 : vector<1x200x256xbf16> to vector<200x256xbf16>
    %c0_2 = arith.constant 0 : index
    %c0_3 = arith.constant 0 : index
    %2 = vector.load %arg3[%c0_2, %c0_3] : memref<8x200xbf16, #tpu.memory_space<vmem>>, vector<8x200xbf16>
    %cst = arith.constant dense<0.000000e+00> : vector<8x256xf32>
    %3 = tpu.matmul %2, %1, %cst {dimension_numbers = #tpu.dot_dimension_numbers<[1], [0], [0], [1], [0, 0, 1, 1], [], []>} : vector<8x200xbf16>, vector<200x256xbf16>, vector<8x256xf32> -> vector<8x256xf32>
    %c0_4 = arith.constant 0 : index
    %c0_5 = arith.constant 0 : index
    %4 = vector.load %arg4[%c0_4, %c0_5] : memref<8x1xf32, #tpu.memory_space<vmem>>, vector<8x1xf32>
    %5 = vector.broadcast %4 : vector<8x1xf32> to vector<8x256xf32>
    %6 = arith.addf %3, %5 : vector<8x256xf32>
    %7 = arith.truncf %6 : vector<8x256xf32> to vector<8x256xbf16>
    %c0_6 = arith.constant 0 : index
    %c0_7 = arith.constant 0 : index
    %c0_8 = arith.constant 0 : index
    %8 = vector.load %arg5[%c0_6, %c0_7, %c0_8] : memref<1x8x256xbf16, #tpu.memory_space<vmem>>, vector<1x8x256xbf16>
    %9 = vector.shape_cast %8 : vector<1x8x256xbf16> to vector<8x256xbf16>
    %10 = vector.shape_cast %7 : vector<8x256xbf16> to vector<1x8x256xbf16>
    tpu.vector_store %arg5[%c0_6, %c0_7, %c0_8], %10 {strides = array<i32>} : memref<1x8x256xbf16, #tpu.memory_space<vmem>>, vector<1x8x256xbf16>,
    %cst_9 = arith.constant dense<0.000000e+00> : vector<8xf32>
    %11 = vector.multi_reduction <add>, %6, %cst_9 [1] : vector<8x256xf32> to vector<8xf32>
    %12 = vector.shape_cast %11 : vector<8xf32> to vector<8x1xf32>
    %13 = arith.mulf %6, %6 : vector<8x256xf32>
    %cst_10 = arith.constant dense<0.000000e+00> : vector<8xf32>
    %14 = vector.multi_reduction <add>, %13, %cst_10 [1] : vector<8x256xf32> to vector<8xf32>
    %15 = vector.shape_cast %14 : vector<8xf32> to vector<8x1xf32>
    %c0_i32 = arith.constant 0 : i32
    %16 = arith.cmpi eq, %arg1, %c0_i32 : i32
    %17 = arith.extui %16 : i1 to i32
    %c0_i32_11 = arith.constant 0 : i32
    %18 = arith.cmpi ne, %17, %c0_i32_11 : i32
    scf.if %18 {
      %cst_24 = arith.constant 0.000000e+00 : f32
      %27 = vector.broadcast %cst_24 : f32 to vector<1x8x1xf32>
      %c0_25 = arith.constant 0 : index
      %c0_26 = arith.constant 0 : index
      %c0_27 = arith.constant 0 : index
      %28 = vector.load %arg6[%c0_25, %c0_26, %c0_27] : memref<1x8x1xf32, #tpu.memory_space<vmem>>, vector<1x8x1xf32>
      tpu.vector_store %arg6[%c0_25, %c0_26, %c0_27], %27 {strides = array<i32>} : memref<1x8x1xf32, #tpu.memory_space<vmem>>, vector<1x8x1xf32>,
      %cst_28 = arith.constant 0.000000e+00 : f32
      %29 = vector.broadcast %cst_28 : f32 to vector<1x8x1xf32>
      %c0_29 = arith.constant 0 : index
      %c0_30 = arith.constant 0 : index
      %c0_31 = arith.constant 0 : index
      %30 = vector.load %arg7[%c0_29, %c0_30, %c0_31] : memref<1x8x1xf32, #tpu.memory_space<vmem>>, vector<1x8x1xf32>
      tpu.vector_store %arg7[%c0_29, %c0_30, %c0_31], %29 {strides = array<i32>} : memref<1x8x1xf32, #tpu.memory_space<vmem>>, vector<1x8x1xf32>,
    } else {
    }
    %c0_12 = arith.constant 0 : index
    %c0_13 = arith.constant 0 : index
    %c0_14 = arith.constant 0 : index
    %19 = vector.load %arg6[%c0_12, %c0_13, %c0_14] : memref<1x8x1xf32, #tpu.memory_space<vmem>>, vector<1x8x1xf32>
    %20 = vector.shape_cast %12 : vector<8x1xf32> to vector<1x8x1xf32>
    %21 = arith.addf %19, %20 : vector<1x8x1xf32>
    %c0_15 = arith.constant 0 : index
    %c0_16 = arith.constant 0 : index
    %c0_17 = arith.constant 0 : index
    %22 = vector.load %arg6[%c0_15, %c0_16, %c0_17] : memref<1x8x1xf32, #tpu.memory_space<vmem>>, vector<1x8x1xf32>
    tpu.vector_store %arg6[%c0_15, %c0_16, %c0_17], %21 {strides = array<i32>} : memref<1x8x1xf32, #tpu.memory_space<vmem>>, vector<1x8x1xf32>,
    %c0_18 = arith.constant 0 : index
    %c0_19 = arith.constant 0 : index
    %c0_20 = arith.constant 0 : index
    %23 = vector.load %arg7[%c0_18, %c0_19, %c0_20] : memref<1x8x1xf32, #tpu.memory_space<vmem>>, vector<1x8x1xf32>
    %24 = vector.shape_cast %15 : vector<8x1xf32> to vector<1x8x1xf32>
    %25 = arith.addf %23, %24 : vector<1x8x1xf32>
    %c0_21 = arith.constant 0 : index
    %c0_22 = arith.constant 0 : index
    %c0_23 = arith.constant 0 : index
    %26 = vector.load %arg7[%c0_21, %c0_22, %c0_23] : memref<1x8x1xf32, #tpu.memory_space<vmem>>, vector<1x8x1xf32>
    tpu.vector_store %arg7[%c0_21, %c0_22, %c0_23], %25 {strides = array<i32>} : memref<1x8x1xf32, #tpu.memory_space<vmem>>, vector<1x8x1xf32>,
    return
  }
  func.func @transform_0(%arg0: i32, %arg1: i32) -> (i32, i32, i32) {
    %c0_i32 = arith.constant 0 : i32
    %c0_i32_0 = arith.constant 0 : i32
    return %arg0, %c0_i32, %arg1 : i32, i32, i32
  }
  func.func @transform_1(%arg0: i32, %arg1: i32) -> (i32, i32) {
    %c0_i32 = arith.constant 0 : i32
    %c0_i32_0 = arith.constant 0 : i32
    %c0_i32_1 = arith.constant 0 : i32
    return %c0_i32, %c0_i32_0 : i32, i32
  }
  func.func @transform_2(%arg0: i32, %arg1: i32) -> (i32, i32) {
    %c0_i32 = arith.constant 0 : i32
    %c0_i32_0 = arith.constant 0 : i32
    %c0_i32_1 = arith.constant 0 : i32
    return %c0_i32, %c0_i32_0 : i32, i32
  }
  func.func @transform_3(%arg0: i32, %arg1: i32) -> (i32, i32, i32) {
    %c0_i32 = arith.constant 0 : i32
    %c0_i32_0 = arith.constant 0 : i32
    return %arg0, %c0_i32, %arg1 : i32, i32, i32
  }
  func.func @transform_4(%arg0: i32, %arg1: i32) -> (i32, i32, i32) {
    %c0_i32 = arith.constant 0 : i32
    %c0_i32_0 = arith.constant 0 : i32
    %c0_i32_1 = arith.constant 0 : i32
    return %arg0, %c0_i32, %c0_i32_0 : i32, i32, i32
  }
  func.func @transform_5(%arg0: i32, %arg1: i32) -> (i32, i32, i32) {
    %c0_i32 = arith.constant 0 : i32
    %c0_i32_0 = arith.constant 0 : i32
    %c0_i32_1 = arith.constant 0 : i32
    return %arg0, %c0_i32, %c0_i32_0 : i32, i32, i32
  }
}

module attributes {stable_mosaic.version = 11 : i64} {
  func.func @bn_relu_kernel(%arg0: i32, %arg1: i32, %arg2: memref<1x8x256xbf16, #tpu.memory_space<vmem>>, %arg3: memref<8x1xf32, #tpu.memory_space<vmem>>, %arg4: memref<8x1xf32, #tpu.memory_space<vmem>>, %arg5: memref<1x8x256xf32, #tpu.memory_space<vmem>>) attributes {dimension_semantics = [#tpu.dimension_semantics<parallel>, #tpu.dimension_semantics<parallel>], iteration_bounds = array<i64: 2, 1>, scalar_prefetch = 0 : i64, scratch_operands = 0 : i64, tpu.core_type = #tpu.core_type<tc>, window_params = [{transform_indices = @transform_0, window_bounds = array<i64: 1, 8, 256>}, {pipeline_mode = #tpu.pipeline_mode<synchronous>, transform_indices = @transform_1, window_bounds = array<i64: 8, 1>}, {pipeline_mode = #tpu.pipeline_mode<synchronous>, transform_indices = @transform_2, window_bounds = array<i64: 8, 1>}, {transform_indices = @transform_3, window_bounds = array<i64: 1, 8, 256>}]} {
    %c0 = arith.constant 0 : index
    %c0_0 = arith.constant 0 : index
    %c0_1 = arith.constant 0 : index
    %0 = vector.load %arg2[%c0, %c0_0, %c0_1] : memref<1x8x256xbf16, #tpu.memory_space<vmem>>, vector<1x8x256xbf16>
    %1 = vector.shape_cast %0 : vector<1x8x256xbf16> to vector<8x256xbf16>
    %2 = arith.extf %1 : vector<8x256xbf16> to vector<8x256xf32>
    %c0_2 = arith.constant 0 : index
    %c0_3 = arith.constant 0 : index
    %3 = vector.load %arg3[%c0_2, %c0_3] : memref<8x1xf32, #tpu.memory_space<vmem>>, vector<8x1xf32>
    %4 = vector.broadcast %3 : vector<8x1xf32> to vector<8x256xf32>
    %5 = arith.mulf %2, %4 : vector<8x256xf32>
    %c0_4 = arith.constant 0 : index
    %c0_5 = arith.constant 0 : index
    %6 = vector.load %arg4[%c0_4, %c0_5] : memref<8x1xf32, #tpu.memory_space<vmem>>, vector<8x1xf32>
    %7 = vector.broadcast %6 : vector<8x1xf32> to vector<8x256xf32>
    %8 = arith.addf %5, %7 : vector<8x256xf32>
    %cst = arith.constant 0.000000e+00 : f32
    %9 = vector.broadcast %cst : f32 to vector<8x256xf32>
    %10 = arith.maximumf %8, %9 : vector<8x256xf32>
    %c0_6 = arith.constant 0 : index
    %c0_7 = arith.constant 0 : index
    %c0_8 = arith.constant 0 : index
    %11 = vector.load %arg5[%c0_6, %c0_7, %c0_8] : memref<1x8x256xf32, #tpu.memory_space<vmem>>, vector<1x8x256xf32>
    %12 = vector.shape_cast %11 : vector<1x8x256xf32> to vector<8x256xf32>
    %13 = vector.shape_cast %10 : vector<8x256xf32> to vector<1x8x256xf32>
    tpu.vector_store %arg5[%c0_6, %c0_7, %c0_8], %13 {strides = array<i32>} : memref<1x8x256xf32, #tpu.memory_space<vmem>>, vector<1x8x256xf32>,
    return
  }
  func.func @transform_0(%arg0: i32, %arg1: i32) -> (i32, i32, i32) {
    %c0_i32 = arith.constant 0 : i32
    %c0_i32_0 = arith.constant 0 : i32
    return %arg0, %c0_i32, %arg1 : i32, i32, i32
  }
  func.func @transform_1(%arg0: i32, %arg1: i32) -> (i32, i32) {
    %c0_i32 = arith.constant 0 : i32
    %c0_i32_0 = arith.constant 0 : i32
    %c0_i32_1 = arith.constant 0 : i32
    return %c0_i32, %c0_i32_0 : i32, i32
  }
  func.func @transform_2(%arg0: i32, %arg1: i32) -> (i32, i32) {
    %c0_i32 = arith.constant 0 : i32
    %c0_i32_0 = arith.constant 0 : i32
    %c0_i32_1 = arith.constant 0 : i32
    return %c0_i32, %c0_i32_0 : i32, i32
  }
  func.func @transform_3(%arg0: i32, %arg1: i32) -> (i32, i32, i32) {
    %c0_i32 = arith.constant 0 : i32
    %c0_i32_0 = arith.constant 0 : i32
    return %arg0, %c0_i32, %arg1 : i32, i32, i32
  }
}

</mosaic_0001>

<llo_original>
// kernel: double_conv_forward.3
$region0: #{double_conv_forward.3}
  #allocation0 [shape = 'u32[]', space=smem, size = 0x4, offset = 0x4, fixed_abs, tag = 'smem constant byte address 0x4 - core index']
  #allocation1 [shape = 'u32[72,128]{1,0:T(1,128)}', space=vmem, size = 0x9000, scoped, tag = 'internal scratch']
  %s0 = inlined_call_operand.vmem [shape: bf16[2,100,256], index: 0, kind: input, shape index: {}]
  %s1 = inlined_call_operand.vmem [shape: bf16[8,100], index: 1, kind: input, shape index: {}]
  %s2 = inlined_call_operand.vmem [shape: f32[8,1], index: 2, kind: input, shape index: {}]
  %s3 = inlined_call_operand.vmem [shape: bf16[2,8,256], index: 3, kind: output, shape index: {0}]
  %s4 = inlined_call_operand.vmem [shape: f32[2,8,1], index: 4, kind: output, shape index: {1}]
  %s5 = inlined_call_operand.vmem [shape: f32[2,8,1], index: 5, kind: output, shape index: {2}]
  %6 = xla_tuple %s3, %s4, %s5
  %s7 = sld [smem:[#allocation0]]
  $region65: #{double_conv_forward.3} parent=0
    _
  %s9 = ssub.s32 1, %s7
  %s10 = scalar_select 0, %s9, %s7
  loop: start=0, step=1, limit=4
  $region2: #{double_conv_forward.3} parent=0 // loop_pre_header
    _
  $region3: #{double_conv_forward.3} parent=0 // loop_header
    %s12 = sphi 0, %s16
    %p13 = scmp.ge.s32.totalorder %s12, 4
    %s19 = sphi 0, %s31
    %s20 = sphi 0, %s27
    %s21 = sphi 0, %s19
    %s22 = sphi 0, %s20
    %s23 = sphi 0, %s21
    %s24 = sphi 0, %s22
    %s36 = sphi 0, %s38
    %s39 = sphi 0, %s36
    %s40 = sphi 0, %s39
    %s56 = sphi 0, %s40
    %s60 = sphi 0, %s60
    %s62 = sphi 0, %s60
    %s63 = sphi 0, %s62
    %s77 = sphi 0, %s63
    %s81 = sphi 0, %s81
    %s83 = sphi 0, %s81
    %s84 = sphi 0, %s83
    %s98 = sphi 0, %s84
    %s106 = sphi 0, %s108
    %s109 = sphi 0, %s106
    %s110 = sphi 0, %s109
    %s126 = sphi 0, %s110
    %s132 = sphi 0, %s134
    %s135 = sphi 0, %s132
    %s136 = sphi 0, %s135
    %s152 = sphi 0, %s136
    %s158 = sphi 0, %s160
    %s161 = sphi 0, %s158
    %s162 = sphi 0, %s161
    %s178 = sphi 0, %s162
  $region4: #{double_conv_forward.3} parent=0 // loop_header_branch
    %15 = sbr.rel (%p13) target = $region8
  $region5: #{double_conv_forward.3} parent=0 // loop_body
    %s17 = ssub.s32 %s12, 1
    %s18 = ssub.s32 %s12, 2
    %s25 = sadd.s32 1, %s20
    %p26 = scmp.ge.s32.totalorder %s25, 1
    %s27 = scalar_select %p26, 0, %s25
    %s28 = sadd.s32 1, %s19
    %s29 = scalar_select %p26, %s28, %s19
    %p30 = scmp.ge.s32.totalorder %s29, 2
    %s31 = scalar_select %p30, 0, %s29
    %s32 = ssub.s32 %s19, %s31
    %s33 = ssub.s32 %s20, %s27
    %s34 = sor.u32 %s32, %s33
    %p35 = scmp.eq.s32.totalorder %s34, 0
    %s37 = sadd.s32 %s36, 1
    %s38 = scalar_select %p35, %s36, %s37
    %p41 = pneg %p35
    %p42 = scmp.eq.s32.totalorder %s12, 1
    %p43 = por %p41, %p42
    %p44 = scmp.ne.s32.totalorder %s36, %s39
    %p45 = scmp.eq.s32.totalorder %s12, 0
    %p46 = por %p44, %p45
    %p47 = scmp.ne.s32.totalorder %s36, %s39
    %p48 = scmp.eq.s32.totalorder %s17, 1
    %p49 = por %p47, %p48
    %p50 = scmp.ne.s32.totalorder %s39, %s40
    %p51 = scmp.eq.s32.totalorder %s17, 0
    %p52 = por %p50, %p51
    %p53 = scmp.ne.s32.totalorder %s39, %s40
    %p54 = scmp.eq.s32.totalorder %s18, 1
    %p55 = por %p53, %p54
    %p57 = scmp.ne.s32.totalorder %s40, %s56
    %p58 = scmp.eq.s32.totalorder %s18, 0
    %p59 = por %p57, %p58
    %s61 = sadd.s32 %s60, 1
    %p64 = scmp.eq.s32.totalorder %s12, 1
    %p65 = scmp.ne.s32.totalorder %s60, %s62
    %p66 = scmp.eq.s32.totalorder %s12, 0
    %p67 = por %p65, %p66
    %p68 = scmp.ne.s32.totalorder %s60, %s62
    %p69 = scmp.eq.s32.totalorder %s17, 1
    %p70 = por %p68, %p69
    %p71 = scmp.ne.s32.totalorder %s62, %s63
    %p72 = scmp.eq.s32.totalorder %s17, 0
    %p73 = por %p71, %p72
    %p74 = scmp.ne.s32.totalorder %s62, %s63
    %p75 = scmp.eq.s32.totalorder %s18, 1
    %p76 = por %p74, %p75
    %p78 = scmp.ne.s32.totalorder %s63, %s77
    %p79 = scmp.eq.s32.totalorder %s18, 0
    %p80 = por %p78, %p79
    %s82 = sadd.s32 %s81, 1
    %p85 = scmp.eq.s32.totalorder %s12, 1
    %p86 = scmp.ne.s32.totalorder %s81, %s83
    %p87 = scmp.eq.s32.totalorder %s12, 0
    %p88 = por %p86, %p87
    %p89 = scmp.ne.s32.totalorder %s81, %s83
    %p90 = scmp.eq.s32.totalorder %s17, 1
    %p91 = por %p89, %p90
    %p92 = scmp.ne.s32.totalorder %s83, %s84
    %p93 = scmp.eq.s32.totalorder %s17, 0
    %p94 = por %p92, %p93
    %p95 = scmp.ne.s32.totalorder %s83, %s84
    %p96 = scmp.eq.s32.totalorder %s18, 1
    %p97 = por %p95, %p96
    %p99 = scmp.ne.s32.totalorder %s84, %s98
    %p100 = scmp.eq.s32.totalorder %s18, 0
    %p101 = por %p99, %p100
    %s102 = ssub.s32 %s19, %s31
    %s103 = ssub.s32 %s20, %s27
    %s104 = sor.u32 %s102, %s103
    %p105 = scmp.eq.s32.totalorder %s104, 0
    %s107 = sadd.s32 %s106, 1
    %s108 = scalar_select %p105, %s106, %s107
    %p111 = pneg %p105
    %p112 = scmp.eq.s32.totalorder %s12, 1
    %p113 = por %p111, %p112
    %p114 = scmp.ne.s32.totalorder %s106, %s109
    %p115 = scmp.eq.s32.totalorder %s12, 0
    %p116 = por %p114, %p115
    %p117 = scmp.ne.s32.totalorder %s106, %s109
    %p118 = scmp.eq.s32.totalorder %s17, 1
    %p119 = por %p117, %p118
    %p120 = scmp.ne.s32.totalorder %s109, %s110
    %p121 = scmp.eq.s32.totalorder %s17, 0
    %p122 = por %p120, %p121
    %p123 = scmp.ne.s32.totalorder %s109, %s110
    %p124 = scmp.eq.s32.totalorder %s18, 1
    %p125 = por %p123, %p124
    %p127 = scmp.ne.s32.totalorder %s110, %s126
    %p128 = scmp.eq.s32.totalorder %s18, 0
    %p129 = por %p127, %p128
    %s130 = ssub.s32 %s19, %s31
    %p131 = scmp.eq.s32.totalorder %s130, 0
    %s133 = sadd.s32 %s132, 1
    %s134 = scalar_select %p131, %s132, %s133
    %p137 = pneg %p131
    %p138 = scmp.eq.s32.totalorder %s12, 1
    %p139 = por %p137, %p138
    %p140 = scmp.ne.s32.totalorder %s132, %s135
    %p141 = scmp.eq.s32.totalorder %s12, 0
    %p142 = por %p140, %p141
    %p143 = scmp.ne.s32.totalorder %s132, %s135
    %p144 = scmp.eq.s32.totalorder %s17, 1
    %p145 = por %p143, %p144
    %p146 = scmp.ne.s32.totalorder %s135, %s136
    %p147 = scmp.eq.s32.totalorder %s17, 0
    %p148 = por %p146, %p147
    %p149 = scmp.ne.s32.totalorder %s135, %s136
    %p150 = scmp.eq.s32.totalorder %s18, 1
    %p151 = por %p149, %p150
    %p153 = scmp.ne.s32.totalorder %s136, %s152
    %p154 = scmp.eq.s32.totalorder %s18, 0
    %p155 = por %p153, %p154
    %s156 = ssub.s32 %s19, %s31
    %p157 = scmp.eq.s32.totalorder %s156, 0
    %s159 = sadd.s32 %s158, 1
    %s160 = scalar_select %p157, %s158, %s159
    %p163 = pneg %p157
    %p164 = scmp.eq.s32.totalorder %s12, 1
    %p165 = por %p163, %p164
    %p166 = scmp.ne.s32.totalorder %s158, %s161
    %p167 = scmp.eq.s32.totalorder %s12, 0
    %p168 = por %p166, %p167
    %p169 = scmp.ne.s32.totalorder %s158, %s161
    %p170 = scmp.eq.s32.totalorder %s17, 1
    %p171 = por %p169, %p170
    %p172 = scmp.ne.s32.totalorder %s161, %s162
    %p173 = scmp.eq.s32.totalorder %s17, 0
    %p174 = por %p172, %p173
    %p175 = scmp.ne.s32.totalorder %s161, %s162
    %p176 = scmp.eq.s32.totalorder %s18, 1
    %p177 = por %p175, %p176
    %p179 = scmp.ne.s32.totalorder %s162, %s178
    %p180 = scmp.eq.s32.totalorder %s18, 0
    %p181 = por %p179, %p180
    %p182 = scmp.le.s32.totalorder 1, %s12
    %p183 = scmp.lt.s32.totalorder %s12, 3
    %p184 = pnand %p182, %p183
    %p185 = pneg %p184
    // Predicated region
    $region9: #{double_conv_forward.3} parent=5 // pred_check
      _
    $region10: #{double_conv_forward.3} parent=5 // pred_check_branch
      %187 = sbr.rel (%p184) target = $region12
    $region11: #{double_conv_forward.3} parent=5 // pred_region
      %s188 = ssub.s32 %s12, 1
      // Predicated region
      $region13: #{double_conv_forward.3} parent=11 // pred_check
        %p189 = pneg %p73
      $region14: #{double_conv_forward.3} parent=11 // pred_check_branch
        %191 = sbr.rel (%p189) target = $region16
      $region15: #{double_conv_forward.3} parent=11 // pred_region
        _
      $region16: #{double_conv_forward.3} parent=11 // pred_fallthru
        _
      // Predicated region
      $region17: #{double_conv_forward.3} parent=11 // pred_check
        %p192 = pneg %p94
      $region18: #{double_conv_forward.3} parent=11 // pred_check_branch
        %194 = sbr.rel (%p192) target = $region20
      $region19: #{double_conv_forward.3} parent=11 // pred_region
        _
      $region20: #{double_conv_forward.3} parent=11 // pred_fallthru
        _
    $region12: #{double_conv_forward.3} parent=5 // pred_fallthru
      _
    %p195 = scmp.lt.s32.totalorder %s12, 2
    // Predicated region
    $region21: #{double_conv_forward.3} parent=5 // pred_check
      %p196 = pneg %p195
    $region22: #{double_conv_forward.3} parent=5 // pred_check_branch
      %198 = sbr.rel (%p196) target = $region24
    $region23: #{double_conv_forward.3} parent=5 // pred_region
      // Predicated region
      $region25: #{double_conv_forward.3} parent=23 // pred_check
        %p199 = pneg %p46
      $region26: #{double_conv_forward.3} parent=23 // pred_check_branch
        %201 = sbr.rel (%p199) target = $region28
      $region27: #{double_conv_forward.3} parent=23 // pred_region
        %s202 = smul.u32 2, %s20
        %p203 = scmp.lt.s32.totalorder %s19, 1
        %s204 = scalar_select %p203, %s19, 1
        %p205 = scmp.lt.s32.totalorder %s202, 1
        %s206 = scalar_select %p205, %s202, 1
        %s207 = smul.addr %s204, 26
        %s208 = sadd.s32 %s206, %s207
        %s209 = smul.addr %s208, 4
        %s210 = scalar_lea.vmem %s0, %s209
        %s211 = smul.u32 2, %s20
      $region28: #{double_conv_forward.3} parent=23 // pred_fallthru
        _
    $region24: #{double_conv_forward.3} parent=5 // pred_fallthru
      _
    %p212 = scmp.le.s32.totalorder 1, %s12
    %p213 = scmp.lt.s32.totalorder %s12, 3
    %p214 = pnand %p212, %p213
    %p215 = pneg %p214
    // Predicated region
    $region29: #{double_conv_forward.3} parent=5 // pred_check
      _
    $region30: #{double_conv_forward.3} parent=5 // pred_check_branch
      %217 = sbr.rel (%p214) target = $region32
    $region31: #{double_conv_forward.3} parent=5 // pred_region
      %s218 = ssub.s32 %s12, 1
      %s219 = smul.u32 2, %s22
      %p220 = scmp.lt.s32.totalorder %s21, 1
      %s221 = scalar_select %p220, %s21, 1
      %p222 = scmp.lt.s32.totalorder %s219, 1
      %s223 = scalar_select %p222, %s219, 1
      %s224 = smul.addr %s221, 26
      %s225 = sadd.s32 %s223, %s224
      %s226 = smul.addr %s225, 4
      %s227 = scalar_lea.vmem %s0, %s226
      %p228 = pneg %p52
      %p229 = pneg %p49
      %p230 = pneg %p73
      %p231 = pneg %p70
      %p232 = pneg %p94
      %p233 = pneg %p91
      %p234 = pneg %p122
      %p235 = pneg %p119
      %s236 = smul.u32 2, %s22
      %p237 = scmp.lt.s32.totalorder %s21, 1
      %s238 = scalar_select %p237, %s21, 1
      %p239 = scmp.lt.s32.totalorder %s236, 1
      %s240 = scalar_select %p239, %s236, 1
      %s241 = smul.addr %s238, 2
      %s242 = sadd.s32 %s240, %s241
      %s243 = smul.addr %s242, 4
      %s244 = scalar_lea.vmem %s3, %s243
      %p245 = pneg %p148
      %p246 = pneg %p145
      %p247 = scmp.lt.s32.totalorder %s21, 1
      %s248 = scalar_select %p247, %s21, 1
      %s249 = smul.addr %s248, 8
      %s250 = scalar_lea.vmem %s4, %s249
      %p251 = pneg %p174
      %p252 = pneg %p171
      %p253 = scmp.lt.s32.totalorder %s21, 1
      %s254 = scalar_select %p253, %s21, 1
      %s255 = smul.addr %s254, 8
      %s256 = scalar_lea.vmem %s5, %s255
      %s257 = smul.u32 2, %s22
      %p258 = scmp.lt.s32.totalorder %s21, 1
      %s259 = scalar_select %p258, %s21, 1
      %p260 = scmp.lt.s32.totalorder %s257, 1
      %s261 = scalar_select %p260, %s257, 1
      %s262 = smul.addr %s259, 26
      %s263 = sadd.s32 %s261, %s262
      %s264 = smul.addr %s263, 4
      %s265 = scalar_lea.vmem %s0, %s264
      %s266 = smul.u32 2, %s22
      %s267 = smul.u32 2, %s22
      %p268 = scmp.lt.s32.totalorder %s21, 1
      %s269 = scalar_select %p268, %s21, 1
      %p270 = scmp.lt.s32.totalorder %s267, 1
      %s271 = scalar_select %p270, %s267, 1
      %s272 = smul.addr %s269, 2
      %s273 = sadd.s32 %s271, %s272
      %s274 = smul.addr %s273, 4
      %s275 = scalar_lea.vmem %s3, %s274
      %s276 = smul.u32 2, %s22
      %p277 = scmp.lt.s32.totalorder %s21, 1
      %s278 = scalar_select %p277, %s21, 1
      %s279 = smul.addr %s278, 8
      %s280 = scalar_lea.vmem %s4, %s279
      %p281 = scmp.lt.s32.totalorder %s21, 1
      %s282 = scalar_select %p281, %s21, 1
      %s283 = smul.addr %s282, 8
      %s284 = scalar_lea.vmem %s5, %s283
      %v286 = vld [vmem:[%s265] sm:$0xff]
      %v287 = vld [vmem:[%s265 + $0x8] sm:$0xff]
      %v288 = vld [vmem:[%s265 + $0x10] sm:$0xff]
      %v289 = vld [vmem:[%s265 + $0x18] sm:$0xff]
      %v290 = vld [vmem:[%s265 + $0x20] sm:$0xff]
      %v291 = vld [vmem:[%s265 + $0x28] sm:$0xff]
      %v292 = vld [vmem:[%s265 + $0x30] sm:$0xff]
      %v293 = vld [vmem:[%s265 + $0x38] sm:$0xff]
      %v294 = vld [vmem:[%s265 + $0x40] sm:$0xff]
      %v295 = vld [vmem:[%s265 + $0x48] sm:$0xff]
      %v296 = vld [vmem:[%s265 + $0x50] sm:$0xff]
      %v297 = vld [vmem:[%s265 + $0x58] sm:$0xff]
      %v298 = vld [vmem:[%s265 + $0x60] sm:$0x33]
      %v299 = vld [vmem:[%s1] sm:$0xf]
      %v300 = vld [vmem:[%s2] sm:$0xff]
      %302 = vset.pattern.permute.xlu0 0
      %303 = vperm.xlu0 %302, %v300
      %v304 = vpop.permute.xlu0 %303
      %v319 = vunpack.c.l.b16 %v286
      %v320 = vunpack.c.h.b16 %v286
      %v321 = vunpack.c.l.b16 %v287
      %v322 = vunpack.c.h.b16 %v287
      %v323 = vunpack.c.l.b16 %v288
      %v324 = vunpack.c.h.b16 %v288
      %v325 = vunpack.c.l.b16 %v289
      %v326 = vunpack.c.h.b16 %v289
      %v327 = vunpack.c.l.b16 %v290
      %v328 = vunpack.c.h.b16 %v290
      %v329 = vunpack.c.l.b16 %v291
      %v330 = vunpack.c.h.b16 %v291
      %v331 = vunpack.c.l.b16 %v292
      %v332 = vunpack.c.h.b16 %v292
      %v333 = vunpack.c.l.b16 %v293
      %v334 = vunpack.c.h.b16 %v293
      %v335 = vunpack.c.l.b16 %v294
      %v336 = vunpack.c.h.b16 %v294
      %v337 = vunpack.c.l.b16 %v295
      %v338 = vunpack.c.h.b16 %v295
      %v339 = vunpack.c.l.b16 %v296
      %v340 = vunpack.c.h.b16 %v296
      %v341 = vunpack.c.l.b16 %v297
      %v342 = vunpack.c.h.b16 %v297
      %v343 = vunpack.c.l.b16 %v298
      %v344 = vunpack.c.h.b16 %v298
      %v345 = vpack.c.b16 %v321, %v319
      %v346 = vpack.c.b16 %v322, %v320
      %v347 = vpack.c.b16 %v325, %v323
      %v348 = vpack.c.b16 %v326, %v324
      %v349 = vpack.c.b16 %v329, %v327
      %v350 = vpack.c.b16 %v330, %v328
      %v351 = vpack.c.b16 %v333, %v331
      %v352 = vpack.c.b16 %v334, %v332
      %v353 = vpack.c.b16 %v337, %v335
      %v354 = vpack.c.b16 %v338, %v336
      %v355 = vpack.c.b16 %v341, %v339
      %v356 = vpack.c.b16 %v342, %v340
      %v357 = vpack.c.b16 %v343, %v343
      %v358 = vpack.c.b16 %v344, %v344
      %vm371 = vcmask 818176
      %v373 = vsel %vm371, %v299, 0
      %vm375 = vcmask 1041408
      %v377 = vsel %vm375, %v357, 0
      %v380 = vsel %vm375, %v358, 0
      %382 = vmatpush.bf16.msra.mxu0 0
      %383 = vmatpush.bf16.msra.mxu0 %v377
      %384 = vmatpush.bf16.msra.mxu0 %v355
      %385 = vmatpush.bf16.msra.mxu0 %v353
      %386 = vmatpush.bf16.msra.mxu0 %v351
      %387 = vmatpush.bf16.msra.mxu0 %v349
      %388 = vmatpush.bf16.msra.mxu0 %v347
      %389 = vmatpush.bf16.msra.mxu0 %v345
      %390 = vmatmul.bf16.gmra.mxu0 %v373
      %v391 = vpop.f32.mrf.mxu0
      %v392 = vadd.f32 %v304, %v391
      %v393 = vpop.f32.mrf.mxu0
      %394 = vdwg.mxu0
      %395 = vmatpush.bf16.msra.mxu0 0
      %396 = vmatpush.bf16.msra.mxu0 %v380
      %397 = vmatpush.bf16.msra.mxu0 %v356
      %398 = vmatpush.bf16.msra.mxu0 %v354
      %399 = vmatpush.bf16.msra.mxu0 %v352
      %400 = vmatpush.bf16.msra.mxu0 %v350
      %401 = vmatpush.bf16.msra.mxu0 %v348
      %402 = vmatpush.bf16.msra.mxu0 %v346
      %403 = vmatmul.bf16.gmra.mxu0 %v373
      %v404 = vpop.f32.mrf.mxu0
      %v405 = vadd.f32 %v304, %v404
      %v406 = vpop.f32.mrf.mxu0
      %407 = vdwg.mxu0
      %v408 = vpack.c.bf16 %v405, %v392
      %409 = vst [vmem:[%s275] sm:$0xff] %v408
      %v410 = vadd.f32 %v392, %v405
      %411 = vadd.xlane.f32.xlu0 %v410
      %v412 = vpop.xlane.xlu0 %411
      %v413 = vmul.f32 %v392, %v392
      %v414 = vmul.f32 %v405, %v405
      %v415 = vadd.f32 %v413, %v414
      %416 = vadd.xlane.f32.xlu0 %v415
      %v417 = vpop.xlane.xlu0 %416
      %p418 = scmp.eq.s32.totalorder %s22, 0
      // Predicated region
      $region33: #{double_conv_forward.3} parent=31 // pred_check
        %p419 = pneg %p418
      $region34: #{double_conv_forward.3} parent=31 // pred_check_branch
        %421 = sbr.rel (%p419) target = $region36
      $region35: #{double_conv_forward.3} parent=31 // pred_region
        %vm422 = vcmask 7168
        %423 = vst.msk [vmem:[%s280] sm:$0xff] %vm422, 0.0
        %424 = vst.msk [vmem:[%s284] sm:$0xff] %vm422, 0.0
      $region36: #{double_conv_forward.3} parent=31 // pred_fallthru
        _
      %v425 = vld [vmem:[%s280] sm:$0xff]
      %v426 = vadd.f32 %v425, %v412
      %vm427 = vcmask 7168
      %428 = vst.msk [vmem:[%s280] sm:$0xff] %vm427, %v426
      %v429 = vld [vmem:[%s284] sm:$0xff]
      %v430 = vadd.f32 %v429, %v417
      %431 = vst.msk [vmem:[%s284] sm:$0xff] %vm427, %v430
      %s432 = smul.u32 2, %s22
      %p433 = scmp.lt.s32.totalorder %s21, 1
      %s434 = scalar_select %p433, %s21, 1
      %p435 = scmp.lt.s32.totalorder %s432, 1
      %s436 = scalar_select %p435, %s432, 1
      %s437 = smul.addr %s434, 2
      %s438 = sadd.s32 %s436, %s437
      %s439 = smul.addr %s438, 4
      %s440 = scalar_lea.vmem %s3, %s439
      %p441 = scmp.lt.s32.totalorder %s21, 1
      %s442 = scalar_select %p441, %s21, 1
      %s443 = smul.addr %s442, 8
      %s444 = scalar_lea.vmem %s4, %s443
      %p445 = scmp.lt.s32.totalorder %s21, 1
      %s446 = scalar_select %p445, %s21, 1
      %s447 = smul.addr %s446, 8
      %s448 = scalar_lea.vmem %s5, %s447
      // Predicated region
      $region37: #{double_conv_forward.3} parent=31 // pred_check
        %p449 = pneg %p119
      $region38: #{double_conv_forward.3} parent=31 // pred_check_branch
        %451 = sbr.rel (%p449) target = $region40
      $region39: #{double_conv_forward.3} parent=31 // pred_region
        %s452 = smul.u32 2, %s22
      $region40: #{double_conv_forward.3} parent=31 // pred_fallthru
        _
      // Predicated region
      $region41: #{double_conv_forward.3} parent=31 // pred_check
        %p453 = pneg %p145
      $region42: #{double_conv_forward.3} parent=31 // pred_check_branch
        %455 = sbr.rel (%p453) target = $region44
      $region43: #{double_conv_forward.3} parent=31 // pred_region
        _
      $region44: #{double_conv_forward.3} parent=31 // pred_fallthru
        _
      // Predicated region
      $region45: #{double_conv_forward.3} parent=31 // pred_check
        %p456 = pneg %p171
      $region46: #{double_conv_forward.3} parent=31 // pred_check_branch
        %458 = sbr.rel (%p456) target = $region48
      $region47: #{double_conv_forward.3} parent=31 // pred_region
        _
      $region48: #{double_conv_forward.3} parent=31 // pred_fallthru
        _
    $region32: #{double_conv_forward.3} parent=5 // pred_fallthru
      _
    %p459 = scmp.le.s32.totalorder 2, %s12
    // Predicated region
    $region49: #{double_conv_forward.3} parent=5 // pred_check
      %p460 = pneg %p459
    $region50: #{double_conv_forward.3} parent=5 // pred_check_branch
      %462 = sbr.rel (%p460) target = $region52
    $region51: #{double_conv_forward.3} parent=5 // pred_region
      %s463 = ssub.s32 %s12, 2
      // Predicated region
      $region53: #{double_conv_forward.3} parent=51 // pred_check
        %p464 = pneg %p125
      $region54: #{double_conv_forward.3} parent=51 // pred_check_branch
        %466 = sbr.rel (%p464) target = $region56
      $region55: #{double_conv_forward.3} parent=51 // pred_region
        %s467 = smul.u32 2, %s24
        %p468 = scmp.lt.s32.totalorder %s23, 1
        %s469 = scalar_select %p468, %s23, 1
        %p470 = scmp.lt.s32.totalorder %s467, 1
        %s471 = scalar_select %p470, %s467, 1
        %s472 = smul.addr %s469, 2
        %s473 = sadd.s32 %s471, %s472
        %s474 = smul.addr %s473, 4
        %s475 = scalar_lea.vmem %s3, %s474
      $region56: #{double_conv_forward.3} parent=51 // pred_fallthru
        _
      // Predicated region
      $region57: #{double_conv_forward.3} parent=51 // pred_check
        %p476 = pneg %p151
      $region58: #{double_conv_forward.3} parent=51 // pred_check_branch
        %478 = sbr.rel (%p476) target = $region60
      $region59: #{double_conv_forward.3} parent=51 // pred_region
        %p479 = scmp.lt.s32.totalorder %s23, 1
        %s480 = scalar_select %p479, %s23, 1
        %s481 = smul.addr %s480, 8
        %s482 = scalar_lea.vmem %s4, %s481
      $region60: #{double_conv_forward.3} parent=51 // pred_fallthru
        _
      // Predicated region
      $region61: #{double_conv_forward.3} parent=51 // pred_check
        %p483 = pneg %p177
      $region62: #{double_conv_forward.3} parent=51 // pred_check_branch
        %485 = sbr.rel (%p483) target = $region64
      $region63: #{double_conv_forward.3} parent=51 // pred_region
        %p486 = scmp.lt.s32.totalorder %s23, 1
        %s487 = scalar_select %p486, %s23, 1
        %s488 = smul.addr %s487, 8
        %s489 = scalar_lea.vmem %s5, %s488
      $region64: #{double_conv_forward.3} parent=51 // pred_fallthru
        _
    $region52: #{double_conv_forward.3} parent=5 // pred_fallthru
      _
  $region6: #{double_conv_forward.3} parent=0 // loop_footer
    %s16 = sadd.s32 1, %s12
  $region7: #{double_conv_forward.3} parent=0 // loop_footer_branch
    %11 = sbr.rel target = $region3
  $region8: #{double_conv_forward.3} parent=0 // loop_exit
    _

// kernel: double_conv_forward.4
$region0: #{double_conv_forward.4}
  #allocation0 [shape = 'u32[]', space=smem, size = 0x4, offset = 0x4, fixed_abs, tag = 'smem constant byte address 0x4 - core index']
  #allocation1 [shape = 'u32[72,128]{1,0:T(1,128)}', space=vmem, size = 0x9000, scoped, tag = 'internal scratch']
  %s0 = inlined_call_operand.vmem [shape: bf16[2,200,256], index: 0, kind: input, shape index: {}]
  %s1 = inlined_call_operand.vmem [shape: bf16[8,200], index: 1, kind: input, shape index: {}]
  %s2 = inlined_call_operand.vmem [shape: f32[8,1], index: 2, kind: input, shape index: {}]
  %s3 = inlined_call_operand.vmem [shape: bf16[2,8,256], index: 3, kind: output, shape index: {0}]
  %s4 = inlined_call_operand.vmem [shape: f32[2,8,1], index: 4, kind: output, shape index: {1}]
  %s5 = inlined_call_operand.vmem [shape: f32[2,8,1], index: 5, kind: output, shape index: {2}]
  %6 = xla_tuple %s3, %s4, %s5
  %s7 = sld [smem:[#allocation0]]
  $region65: #{double_conv_forward.4} parent=0
    _
  %s9 = ssub.s32 1, %s7
  %s10 = scalar_select 0, %s9, %s7
  loop: start=0, step=1, limit=4
  $region2: #{double_conv_forward.4} parent=0 // loop_pre_header
    _
  $region3: #{double_conv_forward.4} parent=0 // loop_header
    %s12 = sphi 0, %s16
    %p13 = scmp.ge.s32.totalorder %s12, 4
    %s19 = sphi 0, %s31
    %s20 = sphi 0, %s27
    %s21 = sphi 0, %s19
    %s22 = sphi 0, %s20
    %s23 = sphi 0, %s21
    %s24 = sphi 0, %s22
    %s36 = sphi 0, %s38
    %s39 = sphi 0, %s36
    %s40 = sphi 0, %s39
    %s56 = sphi 0, %s40
    %s60 = sphi 0, %s60
    %s62 = sphi 0, %s60
    %s63 = sphi 0, %s62
    %s77 = sphi 0, %s63
    %s81 = sphi 0, %s81
    %s83 = sphi 0, %s81
    %s84 = sphi 0, %s83
    %s98 = sphi 0, %s84
    %s106 = sphi 0, %s108
    %s109 = sphi 0, %s106
    %s110 = sphi 0, %s109
    %s126 = sphi 0, %s110
    %s132 = sphi 0, %s134
    %s135 = sphi 0, %s132
    %s136 = sphi 0, %s135
    %s152 = sphi 0, %s136
    %s158 = sphi 0, %s160
    %s161 = sphi 0, %s158
    %s162 = sphi 0, %s161
    %s178 = sphi 0, %s162
  $region4: #{double_conv_forward.4} parent=0 // loop_header_branch
    %15 = sbr.rel (%p13) target = $region8
  $region5: #{double_conv_forward.4} parent=0 // loop_body
    %s17 = ssub.s32 %s12, 1
    %s18 = ssub.s32 %s12, 2
    %s25 = sadd.s32 1, %s20
    %p26 = scmp.ge.s32.totalorder %s25, 1
    %s27 = scalar_select %p26, 0, %s25
    %s28 = sadd.s32 1, %s19
    %s29 = scalar_select %p26, %s28, %s19
    %p30 = scmp.ge.s32.totalorder %s29, 2
    %s31 = scalar_select %p30, 0, %s29
    %s32 = ssub.s32 %s19, %s31
    %s33 = ssub.s32 %s20, %s27
    %s34 = sor.u32 %s32, %s33
    %p35 = scmp.eq.s32.totalorder %s34, 0
    %s37 = sadd.s32 %s36, 1
    %s38 = scalar_select %p35, %s36, %s37
    %p41 = pneg %p35
    %p42 = scmp.eq.s32.totalorder %s12, 1
    %p43 = por %p41, %p42
    %p44 = scmp.ne.s32.totalorder %s36, %s39
    %p45 = scmp.eq.s32.totalorder %s12, 0
    %p46 = por %p44, %p45
    %p47 = scmp.ne.s32.totalorder %s36, %s39
    %p48 = scmp.eq.s32.totalorder %s17, 1
    %p49 = por %p47, %p48
    %p50 = scmp.ne.s32.totalorder %s39, %s40
    %p51 = scmp.eq.s32.totalorder %s17, 0
    %p52 = por %p50, %p51
    %p53 = scmp.ne.s32.totalorder %s39, %s40
    %p54 = scmp.eq.s32.totalorder %s18, 1
    %p55 = por %p53, %p54
    %p57 = scmp.ne.s32.totalorder %s40, %s56
    %p58 = scmp.eq.s32.totalorder %s18, 0
    %p59 = por %p57, %p58
    %s61 = sadd.s32 %s60, 1
    %p64 = scmp.eq.s32.totalorder %s12, 1
    %p65 = scmp.ne.s32.totalorder %s60, %s62
    %p66 = scmp.eq.s32.totalorder %s12, 0
    %p67 = por %p65, %p66
    %p68 = scmp.ne.s32.totalorder %s60, %s62
    %p69 = scmp.eq.s32.totalorder %s17, 1
    %p70 = por %p68, %p69
    %p71 = scmp.ne.s32.totalorder %s62, %s63
    %p72 = scmp.eq.s32.totalorder %s17, 0
    %p73 = por %p71, %p72
    %p74 = scmp.ne.s32.totalorder %s62, %s63
    %p75 = scmp.eq.s32.totalorder %s18, 1
    %p76 = por %p74, %p75
    %p78 = scmp.ne.s32.totalorder %s63, %s77
    %p79 = scmp.eq.s32.totalorder %s18, 0
    %p80 = por %p78, %p79
    %s82 = sadd.s32 %s81, 1
    %p85 = scmp.eq.s32.totalorder %s12, 1
    %p86 = scmp.ne.s32.totalorder %s81, %s83
    %p87 = scmp.eq.s32.totalorder %s12, 0
    %p88 = por %p86, %p87
    %p89 = scmp.ne.s32.totalorder %s81, %s83
    %p90 = scmp.eq.s32.totalorder %s17, 1
    %p91 = por %p89, %p90
    %p92 = scmp.ne.s32.totalorder %s83, %s84
    %p93 = scmp.eq.s32.totalorder %s17, 0
    %p94 = por %p92, %p93
    %p95 = scmp.ne.s32.totalorder %s83, %s84
    %p96 = scmp.eq.s32.totalorder %s18, 1
    %p97 = por %p95, %p96
    %p99 = scmp.ne.s32.totalorder %s84, %s98
    %p100 = scmp.eq.s32.totalorder %s18, 0
    %p101 = por %p99, %p100
    %s102 = ssub.s32 %s19, %s31
    %s103 = ssub.s32 %s20, %s27
    %s104 = sor.u32 %s102, %s103
    %p105 = scmp.eq.s32.totalorder %s104, 0
    %s107 = sadd.s32 %s106, 1
    %s108 = scalar_select %p105, %s106, %s107
    %p111 = pneg %p105
    %p112 = scmp.eq.s32.totalorder %s12, 1
    %p113 = por %p111, %p112
    %p114 = scmp.ne.s32.totalorder %s106, %s109
    %p115 = scmp.eq.s32.totalorder %s12, 0
    %p116 = por %p114, %p115
    %p117 = scmp.ne.s32.totalorder %s106, %s109
    %p118 = scmp.eq.s32.totalorder %s17, 1
    %p119 = por %p117, %p118
    %p120 = scmp.ne.s32.totalorder %s109, %s110
    %p121 = scmp.eq.s32.totalorder %s17, 0
    %p122 = por %p120, %p121
    %p123 = scmp.ne.s32.totalorder %s109, %s110
    %p124 = scmp.eq.s32.totalorder %s18, 1
    %p125 = por %p123, %p124
    %p127 = scmp.ne.s32.totalorder %s110, %s126
    %p128 = scmp.eq.s32.totalorder %s18, 0
    %p129 = por %p127, %p128
    %s130 = ssub.s32 %s19, %s31
    %p131 = scmp.eq.s32.totalorder %s130, 0
    %s133 = sadd.s32 %s132, 1
    %s134 = scalar_select %p131, %s132, %s133
    %p137 = pneg %p131
    %p138 = scmp.eq.s32.totalorder %s12, 1
    %p139 = por %p137, %p138
    %p140 = scmp.ne.s32.totalorder %s132, %s135
    %p141 = scmp.eq.s32.totalorder %s12, 0
    %p142 = por %p140, %p141
    %p143 = scmp.ne.s32.totalorder %s132, %s135
    %p144 = scmp.eq.s32.totalorder %s17, 1
    %p145 = por %p143, %p144
    %p146 = scmp.ne.s32.totalorder %s135, %s136
    %p147 = scmp.eq.s32.totalorder %s17, 0
    %p148 = por %p146, %p147
    %p149 = scmp.ne.s32.totalorder %s135, %s136
    %p150 = scmp.eq.s32.totalorder %s18, 1
    %p151 = por %p149, %p150
    %p153 = scmp.ne.s32.totalorder %s136, %s152
    %p154 = scmp.eq.s32.totalorder %s18, 0
    %p155 = por %p153, %p154
    %s156 = ssub.s32 %s19, %s31
    %p157 = scmp.eq.s32.totalorder %s156, 0
    %s159 = sadd.s32 %s158, 1
    %s160 = scalar_select %p157, %s158, %s159
    %p163 = pneg %p157
    %p164 = scmp.eq.s32.totalorder %s12, 1
    %p165 = por %p163, %p164
    %p166 = scmp.ne.s32.totalorder %s158, %s161
    %p167 = scmp.eq.s32.totalorder %s12, 0
    %p168 = por %p166, %p167
    %p169 = scmp.ne.s32.totalorder %s158, %s161
    %p170 = scmp.eq.s32.totalorder %s17, 1
    %p171 = por %p169, %p170
    %p172 = scmp.ne.s32.totalorder %s161, %s162
    %p173 = scmp.eq.s32.totalorder %s17, 0
    %p174 = por %p172, %p173
    %p175 = scmp.ne.s32.totalorder %s161, %s162
    %p176 = scmp.eq.s32.totalorder %s18, 1
    %p177 = por %p175, %p176
    %p179 = scmp.ne.s32.totalorder %s162, %s178
    %p180 = scmp.eq.s32.totalorder %s18, 0
    %p181 = por %p179, %p180
    %p182 = scmp.le.s32.totalorder 1, %s12
    %p183 = scmp.lt.s32.totalorder %s12, 3
    %p184 = pnand %p182, %p183
    %p185 = pneg %p184
    // Predicated region
    $region9: #{double_conv_forward.4} parent=5 // pred_check
      _
    $region10: #{double_conv_forward.4} parent=5 // pred_check_branch
      %187 = sbr.rel (%p184) target = $region12
    $region11: #{double_conv_forward.4} parent=5 // pred_region
      %s188 = ssub.s32 %s12, 1
      // Predicated region
      $region13: #{double_conv_forward.4} parent=11 // pred_check
        %p189 = pneg %p73
      $region14: #{double_conv_forward.4} parent=11 // pred_check_branch
        %191 = sbr.rel (%p189) target = $region16
      $region15: #{double_conv_forward.4} parent=11 // pred_region
        _
      $region16: #{double_conv_forward.4} parent=11 // pred_fallthru
        _
      // Predicated region
      $region17: #{double_conv_forward.4} parent=11 // pred_check
        %p192 = pneg %p94
      $region18: #{double_conv_forward.4} parent=11 // pred_check_branch
        %194 = sbr.rel (%p192) target = $region20
      $region19: #{double_conv_forward.4} parent=11 // pred_region
        _
      $region20: #{double_conv_forward.4} parent=11 // pred_fallthru
        _
    $region12: #{double_conv_forward.4} parent=5 // pred_fallthru
      _
    %p195 = scmp.lt.s32.totalorder %s12, 2
    // Predicated region
    $region21: #{double_conv_forward.4} parent=5 // pred_check
      %p196 = pneg %p195
    $region22: #{double_conv_forward.4} parent=5 // pred_check_branch
      %198 = sbr.rel (%p196) target = $region24
    $region23: #{double_conv_forward.4} parent=5 // pred_region
      // Predicated region
      $region25: #{double_conv_forward.4} parent=23 // pred_check
        %p199 = pneg %p46
      $region26: #{double_conv_forward.4} parent=23 // pred_check_branch
        %201 = sbr.rel (%p199) target = $region28
      $region27: #{double_conv_forward.4} parent=23 // pred_region
        %s202 = smul.u32 2, %s20
        %p203 = scmp.lt.s32.totalorder %s19, 1
        %s204 = scalar_select %p203, %s19, 1
        %p205 = scmp.lt.s32.totalorder %s202, 1
        %s206 = scalar_select %p205, %s202, 1
        %s207 = smul.addr %s204, 50
        %s208 = sadd.s32 %s206, %s207
        %s209 = smul.addr %s208, 4
        %s210 = scalar_lea.vmem %s0, %s209
        %s211 = smul.u32 2, %s20
      $region28: #{double_conv_forward.4} parent=23 // pred_fallthru
        _
    $region24: #{double_conv_forward.4} parent=5 // pred_fallthru
      _
    %p212 = scmp.le.s32.totalorder 1, %s12
    %p213 = scmp.lt.s32.totalorder %s12, 3
    %p214 = pnand %p212, %p213
    %p215 = pneg %p214
    // Predicated region
    $region29: #{double_conv_forward.4} parent=5 // pred_check
      _
    $region30: #{double_conv_forward.4} parent=5 // pred_check_branch
      %217 = sbr.rel (%p214) target = $region32
    $region31: #{double_conv_forward.4} parent=5 // pred_region
      %s218 = ssub.s32 %s12, 1
      %s219 = smul.u32 2, %s22
      %p220 = scmp.lt.s32.totalorder %s21, 1
      %s221 = scalar_select %p220, %s21, 1
      %p222 = scmp.lt.s32.totalorder %s219, 1
      %s223 = scalar_select %p222, %s219, 1
      %s224 = smul.addr %s221, 50
      %s225 = sadd.s32 %s223, %s224
      %s226 = smul.addr %s225, 4
      %s227 = scalar_lea.vmem %s0, %s226
      %p228 = pneg %p52
      %p229 = pneg %p49
      %p230 = pneg %p73
      %p231 = pneg %p70
      %p232 = pneg %p94
      %p233 = pneg %p91
      %p234 = pneg %p122
      %p235 = pneg %p119
      %s236 = smul.u32 2, %s22
      %p237 = scmp.lt.s32.totalorder %s21, 1
      %s238 = scalar_select %p237, %s21, 1
      %p239 = scmp.lt.s32.totalorder %s236, 1
      %s240 = scalar_select %p239, %s236, 1
      %s241 = smul.addr %s238, 2
      %s242 = sadd.s32 %s240, %s241
      %s243 = smul.addr %s242, 4
      %s244 = scalar_lea.vmem %s3, %s243
      %p245 = pneg %p148
      %p246 = pneg %p145
      %p247 = scmp.lt.s32.totalorder %s21, 1
      %s248 = scalar_select %p247, %s21, 1
      %s249 = smul.addr %s248, 8
      %s250 = scalar_lea.vmem %s4, %s249
      %p251 = pneg %p174
      %p252 = pneg %p171
      %p253 = scmp.lt.s32.totalorder %s21, 1
      %s254 = scalar_select %p253, %s21, 1
      %s255 = smul.addr %s254, 8
      %s256 = scalar_lea.vmem %s5, %s255
      %s257 = smul.u32 2, %s22
      %p258 = scmp.lt.s32.totalorder %s21, 1
      %s259 = scalar_select %p258, %s21, 1
      %p260 = scmp.lt.s32.totalorder %s257, 1
      %s261 = scalar_select %p260, %s257, 1
      %s262 = smul.addr %s259, 50
      %s263 = sadd.s32 %s261, %s262
      %s264 = smul.addr %s263, 4
      %s265 = scalar_lea.vmem %s0, %s264
      %s266 = smul.u32 2, %s22
      %s267 = smul.u32 2, %s22
      %p268 = scmp.lt.s32.totalorder %s21, 1
      %s269 = scalar_select %p268, %s21, 1
      %p270 = scmp.lt.s32.totalorder %s267, 1
      %s271 = scalar_select %p270, %s267, 1
      %s272 = smul.addr %s269, 2
      %s273 = sadd.s32 %s271, %s272
      %s274 = smul.addr %s273, 4
      %s275 = scalar_lea.vmem %s3, %s274
      %s276 = smul.u32 2, %s22
      %p277 = scmp.lt.s32.totalorder %s21, 1
      %s278 = scalar_select %p277, %s21, 1
      %s279 = smul.addr %s278, 8
      %s280 = scalar_lea.vmem %s4, %s279
      %p281 = scmp.lt.s32.totalorder %s21, 1
      %s282 = scalar_select %p281, %s21, 1
      %s283 = smul.addr %s282, 8
      %s284 = scalar_lea.vmem %s5, %s283
      %v286 = vld [vmem:[%s265] sm:$0xff]
      %v287 = vld [vmem:[%s265 + $0x8] sm:$0xff]
      %v288 = vld [vmem:[%s265 + $0x10] sm:$0xff]
      %v289 = vld [vmem:[%s265 + $0x18] sm:$0xff]
      %v290 = vld [vmem:[%s265 + $0x20] sm:$0xff]
      %v291 = vld [vmem:[%s265 + $0x28] sm:$0xff]
      %v292 = vld [vmem:[%s265 + $0x30] sm:$0xff]
      %v293 = vld [vmem:[%s265 + $0x38] sm:$0xff]
      %v294 = vld [vmem:[%s265 + $0x40] sm:$0xff]
      %v295 = vld [vmem:[%s265 + $0x48] sm:$0xff]
      %v296 = vld [vmem:[%s265 + $0x50] sm:$0xff]
      %v297 = vld [vmem:[%s265 + $0x58] sm:$0xff]
      %v298 = vld [vmem:[%s265 + $0x60] sm:$0xff]
      %v299 = vld [vmem:[%s265 + $0x68] sm:$0xff]
      %v300 = vld [vmem:[%s265 + $0x70] sm:$0xff]
      %v301 = vld [vmem:[%s265 + $0x78] sm:$0xff]
      %v302 = vld [vmem:[%s265 + $0x80] sm:$0xff]
      %v303 = vld [vmem:[%s265 + $0x88] sm:$0xff]
      %v304 = vld [vmem:[%s265 + $0x90] sm:$0xff]
      %v305 = vld [vmem:[%s265 + $0x98] sm:$0xff]
      %v306 = vld [vmem:[%s265 + $0xa0] sm:$0xff]
      %v307 = vld [vmem:[%s265 + $0xa8] sm:$0xff]
      %v308 = vld [vmem:[%s265 + $0xb0] sm:$0xff]
      %v309 = vld [vmem:[%s265 + $0xb8] sm:$0xff]
      %v310 = vld [vmem:[%s265 + $0xc0] sm:$0xff]
      %v311 = vld [vmem:[%s1] sm:$0xff]
      %v312 = vld [vmem:[%s2] sm:$0xff]
      %314 = vset.pattern.permute.xlu0 0
      %315 = vperm.xlu0 %314, %v312
      %v316 = vpop.permute.xlu0 %315
      %v319 = vunpack.c.l.b16 %v311
      %v320 = vunpack.c.h.b16 %v311
      %v321 = vpack.c.b16 %v319, %v319
      %v322 = vpack.c.b16 %v320, %v320
      %v349 = vunpack.c.l.b16 %v286
      %v350 = vunpack.c.h.b16 %v286
      %v351 = vunpack.c.l.b16 %v287
      %v352 = vunpack.c.h.b16 %v287
      %v353 = vunpack.c.l.b16 %v288
      %v354 = vunpack.c.h.b16 %v288
      %v355 = vunpack.c.l.b16 %v289
      %v356 = vunpack.c.h.b16 %v289
      %v357 = vunpack.c.l.b16 %v290
      %v358 = vunpack.c.h.b16 %v290
      %v359 = vunpack.c.l.b16 %v291
      %v360 = vunpack.c.h.b16 %v291
      %v361 = vunpack.c.l.b16 %v292
      %v362 = vunpack.c.h.b16 %v292
      %v363 = vunpack.c.l.b16 %v293
      %v364 = vunpack.c.h.b16 %v293
      %v365 = vunpack.c.l.b16 %v294
      %v366 = vunpack.c.h.b16 %v294
      %v367 = vunpack.c.l.b16 %v295
      %v368 = vunpack.c.h.b16 %v295
      %v369 = vunpack.c.l.b16 %v296
      %v370 = vunpack.c.h.b16 %v296
      %v371 = vunpack.c.l.b16 %v297
      %v372 = vunpack.c.h.b16 %v297
      %v373 = vunpack.c.l.b16 %v298
      %v374 = vunpack.c.h.b16 %v298
      %v375 = vunpack.c.l.b16 %v299
      %v376 = vunpack.c.h.b16 %v299
      %v377 = vunpack.c.l.b16 %v300
      %v378 = vunpack.c.h.b16 %v300
      %v379 = vunpack.c.l.b16 %v301
      %v380 = vunpack.c.h.b16 %v301
      %v381 = vunpack.c.l.b16 %v302
      %v382 = vunpack.c.h.b16 %v302
      %v383 = vunpack.c.l.b16 %v303
      %v384 = vunpack.c.h.b16 %v303
      %v385 = vunpack.c.l.b16 %v304
      %v386 = vunpack.c.h.b16 %v304
      %v387 = vunpack.c.l.b16 %v305
      %v388 = vunpack.c.h.b16 %v305
      %v389 = vunpack.c.l.b16 %v306
      %v390 = vunpack.c.h.b16 %v306
      %v391 = vunpack.c.l.b16 %v307
      %v392 = vunpack.c.h.b16 %v307
      %v393 = vunpack.c.l.b16 %v308
      %v394 = vunpack.c.h.b16 %v308
      %v395 = vunpack.c.l.b16 %v309
      %v396 = vunpack.c.h.b16 %v309
      %v397 = vunpack.c.l.b16 %v310
      %v398 = vunpack.c.h.b16 %v310
      %v399 = vpack.c.b16 %v351, %v349
      %v400 = vpack.c.b16 %v352, %v350
      %v401 = vpack.c.b16 %v355, %v353
      %v402 = vpack.c.b16 %v356, %v354
      %v403 = vpack.c.b16 %v359, %v357
      %v404 = vpack.c.b16 %v360, %v358
      %v405 = vpack.c.b16 %v363, %v361
      %v406 = vpack.c.b16 %v364, %v362
      %v407 = vpack.c.b16 %v367, %v365
      %v408 = vpack.c.b16 %v368, %v366
      %v409 = vpack.c.b16 %v371, %v369
      %v410 = vpack.c.b16 %v372, %v370
      %v411 = vpack.c.b16 %v375, %v373
      %v412 = vpack.c.b16 %v376, %v374
      %v413 = vpack.c.b16 %v379, %v377
      %v414 = vpack.c.b16 %v380, %v378
      %v415 = vpack.c.b16 %v383, %v381
      %v416 = vpack.c.b16 %v384, %v382
      %v417 = vpack.c.b16 %v387, %v385
      %v418 = vpack.c.b16 %v388, %v386
      %v419 = vpack.c.b16 %v391, %v389
      %v420 = vpack.c.b16 %v392, %v390
      %v421 = vpack.c.b16 %v395, %v393
      %v422 = vpack.c.b16 %v396, %v394
      %v423 = vpack.c.b16 %v397, %v397
      %v424 = vpack.c.b16 %v398, %v398
      %vm449 = vcmask 588800
      %v451 = vsel %vm449, %v322, 0
      %vm453 = vcmask 1043456
      %v455 = vsel %vm453, %v423, 0
      %v458 = vsel %vm453, %v424, 0
      %460 = vmatpush.bf16.msra.mxu0 %v413
      %461 = vmatpush.bf16.msra.mxu0 %v411
      %462 = vmatpush.bf16.msra.mxu0 %v409
      %463 = vmatpush.bf16.msra.mxu0 %v407
      %464 = vmatpush.bf16.msra.mxu0 %v405
      %465 = vmatpush.bf16.msra.mxu0 %v403
      %466 = vmatpush.bf16.msra.mxu0 %v401
      %467 = vmatpush.bf16.msra.mxu0 %v399
      %468 = vmatmul.bf16.gmra.mxu0 %v321
      %v469 = vpop.f32.mrf.mxu0
      %v470 = vadd.f32 %v316, %v469
      %v471 = vpop.f32.mrf.mxu0
      %472 = vdwg.mxu0
      %473 = vmatpush.bf16.msra.mxu0 0
      %474 = vmatpush.bf16.msra.mxu0 0
      %475 = vmatpush.bf16.msra.mxu0 0
      %476 = vmatpush.bf16.msra.mxu0 %v455
      %477 = vmatpush.bf16.msra.mxu0 %v421
      %478 = vmatpush.bf16.msra.mxu0 %v419
      %479 = vmatpush.bf16.msra.mxu0 %v417
      %480 = vmatpush.bf16.msra.mxu0 %v415
      %481 = vmatmul.bf16.gmra.mxu0 %v451
      %v482 = vpop.f32.mrf.mxu0
      %v483 = vadd.f32 %v470, %v482
      %v484 = vpop.f32.mrf.mxu0
      %485 = vdwg.mxu0
      %486 = vmatpush.bf16.msra.mxu0 %v414
      %487 = vmatpush.bf16.msra.mxu0 %v412
      %488 = vmatpush.bf16.msra.mxu0 %v410
      %489 = vmatpush.bf16.msra.mxu0 %v408
      %490 = vmatpush.bf16.msra.mxu0 %v406
      %491 = vmatpush.bf16.msra.mxu0 %v404
      %492 = vmatpush.bf16.msra.mxu0 %v402
      %493 = vmatpush.bf16.msra.mxu0 %v400
      %494 = vmatmul.bf16.gmra.mxu0 %v321
      %v495 = vpop.f32.mrf.mxu0
      %v496 = vadd.f32 %v316, %v495
      %v497 = vpop.f32.mrf.mxu0
      %498 = vdwg.mxu0
      %499 = vmatpush.bf16.msra.mxu0 0
      %500 = vmatpush.bf16.msra.mxu0 0
      %501 = vmatpush.bf16.msra.mxu0 0
      %502 = vmatpush.bf16.msra.mxu0 %v458
      %503 = vmatpush.bf16.msra.mxu0 %v422
      %504 = vmatpush.bf16.msra.mxu0 %v420
      %505 = vmatpush.bf16.msra.mxu0 %v418
      %506 = vmatpush.bf16.msra.mxu0 %v416
      %507 = vmatmul.bf16.gmra.mxu0 %v451
      %v508 = vpop.f32.mrf.mxu0
      %v509 = vadd.f32 %v496, %v508
      %v510 = vpop.f32.mrf.mxu0
      %511 = vdwg.mxu0
      %v512 = vpack.c.bf16 %v509, %v483
      %513 = vst [vmem:[%s275] sm:$0xff] %v512
      %v514 = vadd.f32 %v483, %v509
      %515 = vadd.xlane.f32.xlu0 %v514
      %v516 = vpop.xlane.xlu0 %515
      %v517 = vmul.f32 %v483, %v483
      %v518 = vmul.f32 %v509, %v509
      %v519 = vadd.f32 %v517, %v518
      %520 = vadd.xlane.f32.xlu0 %v519
      %v521 = vpop.xlane.xlu0 %520
      %p522 = scmp.eq.s32.totalorder %s22, 0
      // Predicated region
      $region33: #{double_conv_forward.4} parent=31 // pred_check
        %p523 = pneg %p522
      $region34: #{double_conv_forward.4} parent=31 // pred_check_branch
        %525 = sbr.rel (%p523) target = $region36
      $region35: #{double_conv_forward.4} parent=31 // pred_region
        %vm526 = vcmask 7168
        %527 = vst.msk [vmem:[%s280] sm:$0xff] %vm526, 0.0
        %528 = vst.msk [vmem:[%s284] sm:$0xff] %vm526, 0.0
      $region36: #{double_conv_forward.4} parent=31 // pred_fallthru
        _
      %v529 = vld [vmem:[%s280] sm:$0xff]
      %v530 = vadd.f32 %v529, %v516
      %vm531 = vcmask 7168
      %532 = vst.msk [vmem:[%s280] sm:$0xff] %vm531, %v530
      %v533 = vld [vmem:[%s284] sm:$0xff]
      %v534 = vadd.f32 %v533, %v521
      %535 = vst.msk [vmem:[%s284] sm:$0xff] %vm531, %v534
      %s536 = smul.u32 2, %s22
      %p537 = scmp.lt.s32.totalorder %s21, 1
      %s538 = scalar_select %p537, %s21, 1
      %p539 = scmp.lt.s32.totalorder %s536, 1
      %s540 = scalar_select %p539, %s536, 1
      %s541 = smul.addr %s538, 2
      %s542 = sadd.s32 %s540, %s541
      %s543 = smul.addr %s542, 4
      %s544 = scalar_lea.vmem %s3, %s543
      %p545 = scmp.lt.s32.totalorder %s21, 1
      %s546 = scalar_select %p545, %s21, 1
      %s547 = smul.addr %s546, 8
      %s548 = scalar_lea.vmem %s4, %s547
      %p549 = scmp.lt.s32.totalorder %s21, 1
      %s550 = scalar_select %p549, %s21, 1
      %s551 = smul.addr %s550, 8
      %s552 = scalar_lea.vmem %s5, %s551
      // Predicated region
      $region37: #{double_conv_forward.4} parent=31 // pred_check
        %p553 = pneg %p119
      $region38: #{double_conv_forward.4} parent=31 // pred_check_branch
        %555 = sbr.rel (%p553) target = $region40
      $region39: #{double_conv_forward.4} parent=31 // pred_region
        %s556 = smul.u32 2, %s22
      $region40: #{double_conv_forward.4} parent=31 // pred_fallthru
        _
      // Predicated region
      $region41: #{double_conv_forward.4} parent=31 // pred_check
        %p557 = pneg %p145
      $region42: #{double_conv_forward.4} parent=31 // pred_check_branch
        %559 = sbr.rel (%p557) target = $region44
      $region43: #{double_conv_forward.4} parent=31 // pred_region
        _
      $region44: #{double_conv_forward.4} parent=31 // pred_fallthru
        _
      // Predicated region
      $region45: #{double_conv_forward.4} parent=31 // pred_check
        %p560 = pneg %p171
      $region46: #{double_conv_forward.4} parent=31 // pred_check_branch
        %562 = sbr.rel (%p560) target = $region48
      $region47: #{double_conv_forward.4} parent=31 // pred_region
        _
      $region48: #{double_conv_forward.4} parent=31 // pred_fallthru
        _
    $region32: #{double_conv_forward.4} parent=5 // pred_fallthru
      _
    %p563 = scmp.le.s32.totalorder 2, %s12
    // Predicated region
    $region49: #{double_conv_forward.4} parent=5 // pred_check
      %p564 = pneg %p563
    $region50: #{double_conv_forward.4} parent=5 // pred_check_branch
      %566 = sbr.rel (%p564) target = $region52
    $region51: #{double_conv_forward.4} parent=5 // pred_region
      %s567 = ssub.s32 %s12, 2
      // Predicated region
      $region53: #{double_conv_forward.4} parent=51 // pred_check
        %p568 = pneg %p125
      $region54: #{double_conv_forward.4} parent=51 // pred_check_branch
        %570 = sbr.rel (%p568) target = $region56
      $region55: #{double_conv_forward.4} parent=51 // pred_region
        %s571 = smul.u32 2, %s24
        %p572 = scmp.lt.s32.totalorder %s23, 1
        %s573 = scalar_select %p572, %s23, 1
        %p574 = scmp.lt.s32.totalorder %s571, 1
        %s575 = scalar_select %p574, %s571, 1
        %s576 = smul.addr %s573, 2
        %s577 = sadd.s32 %s575, %s576
        %s578 = smul.addr %s577, 4
        %s579 = scalar_lea.vmem %s3, %s578
      $region56: #{double_conv_forward.4} parent=51 // pred_fallthru
        _
      // Predicated region
      $region57: #{double_conv_forward.4} parent=51 // pred_check
        %p580 = pneg %p151
      $region58: #{double_conv_forward.4} parent=51 // pred_check_branch
        %582 = sbr.rel (%p580) target = $region60
      $region59: #{double_conv_forward.4} parent=51 // pred_region
        %p583 = scmp.lt.s32.totalorder %s23, 1
        %s584 = scalar_select %p583, %s23, 1
        %s585 = smul.addr %s584, 8
        %s586 = scalar_lea.vmem %s4, %s585
      $region60: #{double_conv_forward.4} parent=51 // pred_fallthru
        _
      // Predicated region
      $region61: #{double_conv_forward.4} parent=51 // pred_check
        %p587 = pneg %p177
      $region62: #{double_conv_forward.4} parent=51 // pred_check_branch
        %589 = sbr.rel (%p587) target = $region64
      $region63: #{double_conv_forward.4} parent=51 // pred_region
        %p590 = scmp.lt.s32.totalorder %s23, 1
        %s591 = scalar_select %p590, %s23, 1
        %s592 = smul.addr %s591, 8
        %s593 = scalar_lea.vmem %s5, %s592
      $region64: #{double_conv_forward.4} parent=51 // pred_fallthru
        _
    $region52: #{double_conv_forward.4} parent=5 // pred_fallthru
      _
  $region6: #{double_conv_forward.4} parent=0 // loop_footer
    %s16 = sadd.s32 1, %s12
  $region7: #{double_conv_forward.4} parent=0 // loop_footer_branch
    %11 = sbr.rel target = $region3
  $region8: #{double_conv_forward.4} parent=0 // loop_exit
    _

// kernel: double_conv_forward.5
$region0: #{double_conv_forward.5}
  #allocation0 [shape = 'u32[]', space=smem, size = 0x4, offset = 0x4, fixed_abs, tag = 'smem constant byte address 0x4 - core index']
  #allocation1 [shape = 'u32[72,128]{1,0:T(1,128)}', space=vmem, size = 0x9000, scoped, tag = 'internal scratch']
  %s0 = inlined_call_operand.vmem [shape: bf16[2,8,256], index: 0, kind: input, shape index: {}]
  %s1 = inlined_call_operand.vmem [shape: f32[8,1], index: 1, kind: input, shape index: {}]
  %s2 = inlined_call_operand.vmem [shape: f32[8,1], index: 2, kind: input, shape index: {}]
  %s3 = inlined_call_operand.vmem [shape: f32[2,8,256], index: 3, kind: output, shape index: {}]
  %s4 = sld [smem:[#allocation0]]
  $region45: #{double_conv_forward.5} parent=0
    _
  %s6 = ssub.s32 1, %s4
  %s7 = scalar_select 0, %s6, %s4
  loop: start=0, step=1, limit=4
  $region2: #{double_conv_forward.5} parent=0 // loop_pre_header
    _
  $region3: #{double_conv_forward.5} parent=0 // loop_header
    %s9 = sphi 0, %s13
    %p10 = scmp.ge.s32.totalorder %s9, 4
    %s16 = sphi 0, %s28
    %s17 = sphi 0, %s24
    %s18 = sphi 0, %s16
    %s19 = sphi 0, %s17
    %s20 = sphi 0, %s18
    %s21 = sphi 0, %s19
    %s33 = sphi 0, %s35
    %s36 = sphi 0, %s33
    %s37 = sphi 0, %s36
    %s53 = sphi 0, %s37
    %s57 = sphi 0, %s57
    %s59 = sphi 0, %s57
    %s60 = sphi 0, %s59
    %s74 = sphi 0, %s60
    %s78 = sphi 0, %s78
    %s80 = sphi 0, %s78
    %s81 = sphi 0, %s80
    %s95 = sphi 0, %s81
    %s103 = sphi 0, %s105
    %s106 = sphi 0, %s103
    %s107 = sphi 0, %s106
    %s123 = sphi 0, %s107
  $region4: #{double_conv_forward.5} parent=0 // loop_header_branch
    %12 = sbr.rel (%p10) target = $region8
  $region5: #{double_conv_forward.5} parent=0 // loop_body
    %s14 = ssub.s32 %s9, 1
    %s15 = ssub.s32 %s9, 2
    %s22 = sadd.s32 1, %s17
    %p23 = scmp.ge.s32.totalorder %s22, 1
    %s24 = scalar_select %p23, 0, %s22
    %s25 = sadd.s32 1, %s16
    %s26 = scalar_select %p23, %s25, %s16
    %p27 = scmp.ge.s32.totalorder %s26, 2
    %s28 = scalar_select %p27, 0, %s26
    %s29 = ssub.s32 %s16, %s28
    %s30 = ssub.s32 %s17, %s24
    %s31 = sor.u32 %s29, %s30
    %p32 = scmp.eq.s32.totalorder %s31, 0
    %s34 = sadd.s32 %s33, 1
    %s35 = scalar_select %p32, %s33, %s34
    %p38 = pneg %p32
    %p39 = scmp.eq.s32.totalorder %s9, 1
    %p40 = por %p38, %p39
    %p41 = scmp.ne.s32.totalorder %s33, %s36
    %p42 = scmp.eq.s32.totalorder %s9, 0
    %p43 = por %p41, %p42
    %p44 = scmp.ne.s32.totalorder %s33, %s36
    %p45 = scmp.eq.s32.totalorder %s14, 1
    %p46 = por %p44, %p45
    %p47 = scmp.ne.s32.totalorder %s36, %s37
    %p48 = scmp.eq.s32.totalorder %s14, 0
    %p49 = por %p47, %p48
    %p50 = scmp.ne.s32.totalorder %s36, %s37
    %p51 = scmp.eq.s32.totalorder %s15, 1
    %p52 = por %p50, %p51
    %p54 = scmp.ne.s32.totalorder %s37, %s53
    %p55 = scmp.eq.s32.totalorder %s15, 0
    %p56 = por %p54, %p55
    %s58 = sadd.s32 %s57, 1
    %p61 = scmp.eq.s32.totalorder %s9, 1
    %p62 = scmp.ne.s32.totalorder %s57, %s59
    %p63 = scmp.eq.s32.totalorder %s9, 0
    %p64 = por %p62, %p63
    %p65 = scmp.ne.s32.totalorder %s57, %s59
    %p66 = scmp.eq.s32.totalorder %s14, 1
    %p67 = por %p65, %p66
    %p68 = scmp.ne.s32.totalorder %s59, %s60
    %p69 = scmp.eq.s32.totalorder %s14, 0
    %p70 = por %p68, %p69
    %p71 = scmp.ne.s32.totalorder %s59, %s60
    %p72 = scmp.eq.s32.totalorder %s15, 1
    %p73 = por %p71, %p72
    %p75 = scmp.ne.s32.totalorder %s60, %s74
    %p76 = scmp.eq.s32.totalorder %s15, 0
    %p77 = por %p75, %p76
    %s79 = sadd.s32 %s78, 1
    %p82 = scmp.eq.s32.totalorder %s9, 1
    %p83 = scmp.ne.s32.totalorder %s78, %s80
    %p84 = scmp.eq.s32.totalorder %s9, 0
    %p85 = por %p83, %p84
    %p86 = scmp.ne.s32.totalorder %s78, %s80
    %p87 = scmp.eq.s32.totalorder %s14, 1
    %p88 = por %p86, %p87
    %p89 = scmp.ne.s32.totalorder %s80, %s81
    %p90 = scmp.eq.s32.totalorder %s14, 0
    %p91 = por %p89, %p90
    %p92 = scmp.ne.s32.totalorder %s80, %s81
    %p93 = scmp.eq.s32.totalorder %s15, 1
    %p94 = por %p92, %p93
    %p96 = scmp.ne.s32.totalorder %s81, %s95
    %p97 = scmp.eq.s32.totalorder %s15, 0
    %p98 = por %p96, %p97
    %s99 = ssub.s32 %s16, %s28
    %s100 = ssub.s32 %s17, %s24
    %s101 = sor.u32 %s99, %s100
    %p102 = scmp.eq.s32.totalorder %s101, 0
    %s104 = sadd.s32 %s103, 1
    %s105 = scalar_select %p102, %s103, %s104
    %p108 = pneg %p102
    %p109 = scmp.eq.s32.totalorder %s9, 1
    %p110 = por %p108, %p109
    %p111 = scmp.ne.s32.totalorder %s103, %s106
    %p112 = scmp.eq.s32.totalorder %s9, 0
    %p113 = por %p111, %p112
    %p114 = scmp.ne.s32.totalorder %s103, %s106
    %p115 = scmp.eq.s32.totalorder %s14, 1
    %p116 = por %p114, %p115
    %p117 = scmp.ne.s32.totalorder %s106, %s107
    %p118 = scmp.eq.s32.totalorder %s14, 0
    %p119 = por %p117, %p118
    %p120 = scmp.ne.s32.totalorder %s106, %s107
    %p121 = scmp.eq.s32.totalorder %s15, 1
    %p122 = por %p120, %p121
    %p124 = scmp.ne.s32.totalorder %s107, %s123
    %p125 = scmp.eq.s32.totalorder %s15, 0
    %p126 = por %p124, %p125
    %p127 = scmp.le.s32.totalorder 1, %s9
    %p128 = scmp.lt.s32.totalorder %s9, 3
    %p129 = pnand %p127, %p128
    %p130 = pneg %p129
    // Predicated region
    $region9: #{double_conv_forward.5} parent=5 // pred_check
      _
    $region10: #{double_conv_forward.5} parent=5 // pred_check_branch
      %132 = sbr.rel (%p129) target = $region12
    $region11: #{double_conv_forward.5} parent=5 // pred_region
      %s133 = ssub.s32 %s9, 1
      // Predicated region
      $region13: #{double_conv_forward.5} parent=11 // pred_check
        %p134 = pneg %p70
      $region14: #{double_conv_forward.5} parent=11 // pred_check_branch
        %136 = sbr.rel (%p134) target = $region16
      $region15: #{double_conv_forward.5} parent=11 // pred_region
        _
      $region16: #{double_conv_forward.5} parent=11 // pred_fallthru
        _
      // Predicated region
      $region17: #{double_conv_forward.5} parent=11 // pred_check
        %p137 = pneg %p91
      $region18: #{double_conv_forward.5} parent=11 // pred_check_branch
        %139 = sbr.rel (%p137) target = $region20
      $region19: #{double_conv_forward.5} parent=11 // pred_region
        _
      $region20: #{double_conv_forward.5} parent=11 // pred_fallthru
        _
    $region12: #{double_conv_forward.5} parent=5 // pred_fallthru
      _
    %p140 = scmp.lt.s32.totalorder %s9, 2
    // Predicated region
    $region21: #{double_conv_forward.5} parent=5 // pred_check
      %p141 = pneg %p140
    $region22: #{double_conv_forward.5} parent=5 // pred_check_branch
      %143 = sbr.rel (%p141) target = $region24
    $region23: #{double_conv_forward.5} parent=5 // pred_region
      // Predicated region
      $region25: #{double_conv_forward.5} parent=23 // pred_check
        %p144 = pneg %p43
      $region26: #{double_conv_forward.5} parent=23 // pred_check_branch
        %146 = sbr.rel (%p144) target = $region28
      $region27: #{double_conv_forward.5} parent=23 // pred_region
        %s147 = smul.u32 2, %s17
        %p148 = scmp.lt.s32.totalorder %s16, 1
        %s149 = scalar_select %p148, %s16, 1
        %p150 = scmp.lt.s32.totalorder %s147, 1
        %s151 = scalar_select %p150, %s147, 1
        %s152 = smul.addr %s149, 2
        %s153 = sadd.s32 %s151, %s152
        %s154 = smul.addr %s153, 4
        %s155 = scalar_lea.vmem %s0, %s154
        %s156 = smul.u32 2, %s17
      $region28: #{double_conv_forward.5} parent=23 // pred_fallthru
        _
    $region24: #{double_conv_forward.5} parent=5 // pred_fallthru
      _
    %p157 = scmp.le.s32.totalorder 1, %s9
    %p158 = scmp.lt.s32.totalorder %s9, 3
    %p159 = pnand %p157, %p158
    %p160 = pneg %p159
    // Predicated region
    $region29: #{double_conv_forward.5} parent=5 // pred_check
      _
    $region30: #{double_conv_forward.5} parent=5 // pred_check_branch
      %162 = sbr.rel (%p159) target = $region32
    $region31: #{double_conv_forward.5} parent=5 // pred_region
      %s163 = ssub.s32 %s9, 1
      %s164 = smul.u32 2, %s19
      %p165 = scmp.lt.s32.totalorder %s18, 1
      %s166 = scalar_select %p165, %s18, 1
      %p167 = scmp.lt.s32.totalorder %s164, 1
      %s168 = scalar_select %p167, %s164, 1
      %s169 = smul.addr %s166, 2
      %s170 = sadd.s32 %s168, %s169
      %s171 = smul.addr %s170, 4
      %s172 = scalar_lea.vmem %s0, %s171
      %p173 = pneg %p49
      %p174 = pneg %p46
      %p175 = pneg %p70
      %p176 = pneg %p67
      %p177 = pneg %p91
      %p178 = pneg %p88
      %p179 = pneg %p119
      %p180 = pneg %p116
      %s181 = smul.u32 2, %s19
      %p182 = scmp.lt.s32.totalorder %s18, 1
      %s183 = scalar_select %p182, %s18, 1
      %p184 = scmp.lt.s32.totalorder %s181, 1
      %s185 = scalar_select %p184, %s181, 1
      %s186 = smul.addr %s183, 2
      %s187 = sadd.s32 %s185, %s186
      %s188 = smul.addr %s187, 8
      %s189 = scalar_lea.vmem %s3, %s188
      %s190 = smul.u32 2, %s19
      %p191 = scmp.lt.s32.totalorder %s18, 1
      %s192 = scalar_select %p191, %s18, 1
      %p193 = scmp.lt.s32.totalorder %s190, 1
      %s194 = scalar_select %p193, %s190, 1
      %s195 = smul.addr %s192, 2
      %s196 = sadd.s32 %s194, %s195
      %s197 = smul.addr %s196, 4
      %s198 = scalar_lea.vmem %s0, %s197
      %s199 = smul.u32 2, %s19
      %s200 = smul.u32 2, %s19
      %p201 = scmp.lt.s32.totalorder %s18, 1
      %s202 = scalar_select %p201, %s18, 1
      %p203 = scmp.lt.s32.totalorder %s200, 1
      %s204 = scalar_select %p203, %s200, 1
      %s205 = smul.addr %s202, 2
      %s206 = sadd.s32 %s204, %s205
      %s207 = smul.addr %s206, 8
      %s208 = scalar_lea.vmem %s3, %s207
      %s209 = smul.u32 2, %s19
      %v210 = vld [vmem:[%s198] sm:$0xff]
      %v211 = vunpack.c.l.bf16 %v210
      %v212 = vunpack.c.h.bf16 %v210
      %v213 = vld [vmem:[%s1] sm:$0xff]
      %215 = vset.pattern.permute.xlu0 0
      %216 = vperm.xlu0 %215, %v213
      %v217 = vpop.permute.xlu0 %216
      %v219 = vmul.f32 %v211, %v217
      %v220 = vmul.f32 %v212, %v217
      %v221 = vld [vmem:[%s2] sm:$0xff]
      %223 = vset.pattern.permute.xlu0 0
      %224 = vperm.xlu0 %223, %v221
      %v225 = vpop.permute.xlu0 %224
      %v227 = vadd.f32 %v219, %v225
      %v228 = vadd.f32 %v220, %v225
      %v229 = vmax.f32 %v227, 0.0
      %v230 = vmax.f32 %v228, 0.0
      %231 = vst [vmem:[%s208] sm:$0xff] %v229
      %232 = vst [vmem:[%s208 + $0x8] sm:$0xff] %v230
      %s233 = smul.u32 2, %s19
      %p234 = scmp.lt.s32.totalorder %s18, 1
      %s235 = scalar_select %p234, %s18, 1
      %p236 = scmp.lt.s32.totalorder %s233, 1
      %s237 = scalar_select %p236, %s233, 1
      %s238 = smul.addr %s235, 2
      %s239 = sadd.s32 %s237, %s238
      %s240 = smul.addr %s239, 8
      %s241 = scalar_lea.vmem %s3, %s240
      // Predicated region
      $region33: #{double_conv_forward.5} parent=31 // pred_check
        %p242 = pneg %p116
      $region34: #{double_conv_forward.5} parent=31 // pred_check_branch
        %244 = sbr.rel (%p242) target = $region36
      $region35: #{double_conv_forward.5} parent=31 // pred_region
        %s245 = smul.u32 2, %s19
      $region36: #{double_conv_forward.5} parent=31 // pred_fallthru
        _
    $region32: #{double_conv_forward.5} parent=5 // pred_fallthru
      _
    %p246 = scmp.le.s32.totalorder 2, %s9
    // Predicated region
    $region37: #{double_conv_forward.5} parent=5 // pred_check
      %p247 = pneg %p246
    $region38: #{double_conv_forward.5} parent=5 // pred_check_branch
      %249 = sbr.rel (%p247) target = $region40
    $region39: #{double_conv_forward.5} parent=5 // pred_region
      %s250 = ssub.s32 %s9, 2
      // Predicated region
      $region41: #{double_conv_forward.5} parent=39 // pred_check
        %p251 = pneg %p122
      $region42: #{double_conv_forward.5} parent=39 // pred_check_branch
        %253 = sbr.rel (%p251) target = $region44
      $region43: #{double_conv_forward.5} parent=39 // pred_region
        %s254 = smul.u32 2, %s21
        %p255 = scmp.lt.s32.totalorder %s20, 1
        %s256 = scalar_select %p255, %s20, 1
        %p257 = scmp.lt.s32.totalorder %s254, 1
        %s258 = scalar_select %p257, %s254, 1
        %s259 = smul.addr %s256, 2
        %s260 = sadd.s32 %s258, %s259
        %s261 = smul.addr %s260, 8
        %s262 = scalar_lea.vmem %s3, %s261
      $region44: #{double_conv_forward.5} parent=39 // pred_fallthru
        _
    $region40: #{double_conv_forward.5} parent=5 // pred_fallthru
      _
  $region6: #{double_conv_forward.5} parent=0 // loop_footer
    %s13 = sadd.s32 1, %s9
  $region7: #{double_conv_forward.5} parent=0 // loop_footer_branch
    %8 = sbr.rel target = $region3
  $region8: #{double_conv_forward.5} parent=0 // loop_exit
    _

</llo_original>
